<compile_context>
chip_gen: v7x
topology: tpu7x:2x2x1
jax: 0.10.0
libtpu: 0.0.40
codegen_flags: <defaults>
</compile_context>

<pallas_src>
import math

import jax
import jax.numpy as jnp
from jax.experimental import pallas as pl
from jax.experimental.pallas import tpu as pltpu  # noqa: F401  (TPU backend)

# ---- model dimensions (consistent with the module's config dict) ----
VOCAB = 100
VOCAB_PAD = 128      # pad vocab to the 128-lane axis for the one-hot matmul
BATCH = 2
SEQ = 8              # must be a power of two (cross-batch XOR block mask)
HIDDEN = 32          # config['hidden_size']
HEADS = 4
HEAD_DIM = HIDDEN // HEADS
FFN = 4 * HIDDEN
NUM_CLASSES = 6      # config['num_speakers']
LANES = 128
LN_EPS = 1e-12

assert SEQ & (SEQ - 1) == 0, "SEQ must be a power of two for the block mask"

# ---- packed vec-table row indices (f32 (20, 128) table) ----
R_PEMB = 0                      # rows 0:SEQ  -> positional embeddings
R_LNE_G = SEQ + 0
R_LNE_B = SEQ + 1
R_BQKV = SEQ + 2                # bq|bk|bv packed in lanes 0:96
R_BO = SEQ + 3
R_LN1_G = SEQ + 4
R_LN1_B = SEQ + 5
R_B1 = SEQ + 6
R_B2 = SEQ + 7
R_LN2_G = SEQ + 8
R_LN2_B = SEQ + 9
R_BP = SEQ + 10
R_BC = SEQ + 11
VEC_ROWS = SEQ + 12

# ---- packed 32-column bf16 slab row offsets ----
S32_WEMB = 0
S32_WO = VOCAB_PAD
S32_W2 = VOCAB_PAD + HIDDEN
S32_WP = VOCAB_PAD + HIDDEN + FFN
S32_ROWS = VOCAB_PAD + 2 * HIDDEN + FFN          # 320

# ---- packed 128-column bf16 slab row offsets ----
S128_WQKV = 0
S128_W1 = HIDDEN
S128_WC = 2 * HIDDEN
S128_ROWS = 3 * HIDDEN                           # 96


def _layer_norm(x, g, b):
    mu = jnp.mean(x, axis=-1, keepdims=True)
    var = jnp.mean((x - mu) ** 2, axis=-1, keepdims=True)
    return (x - mu) * jax.lax.rsqrt(var + LN_EPS) * g + b


# ---------------------------------------------------------------------------
# Fused kernel: embeddings + encoder layer + pooler + classifier, one step.
# ---------------------------------------------------------------------------
def fused_kernel(ids_ref, mask_ref, slab32_ref, slab128_ref, vec_ref,
                 hid_ref, pool_ref, logits_ref):
    f32 = jnp.float32
    bf16 = jnp.bfloat16
    rows = ids_ref.shape[0]           # batch * SEQ
    batch = rows // SEQ

    # ---- unpack packed f32 vec table (pemb + biases + LN params) ----
    pemb = vec_ref[R_PEMB:R_PEMB + SEQ, :HIDDEN]           # (SEQ, HIDDEN)
    lne_g = vec_ref[R_LNE_G:R_LNE_G + 1, :HIDDEN]
    lne_b = vec_ref[R_LNE_B:R_LNE_B + 1, :HIDDEN]
    bqkv = vec_ref[R_BQKV:R_BQKV + 1, :]                   # (1, 128): bq|bk|bv|0
    bo = vec_ref[R_BO:R_BO + 1, :HIDDEN]
    ln1_g = vec_ref[R_LN1_G:R_LN1_G + 1, :HIDDEN]
    ln1_b = vec_ref[R_LN1_B:R_LN1_B + 1, :HIDDEN]
    b1 = vec_ref[R_B1:R_B1 + 1, :FFN]
    b2 = vec_ref[R_B2:R_B2 + 1, :HIDDEN]
    ln2_g = vec_ref[R_LN2_G:R_LN2_G + 1, :HIDDEN]
    ln2_b = vec_ref[R_LN2_B:R_LN2_B + 1, :HIDDEN]
    bp = vec_ref[R_BP:R_BP + 1, :HIDDEN]
    bc = vec_ref[R_BC:R_BC + 1, :]                         # (1, 128): classes|0

    # ---- unpack bf16 weight slabs (static row slices, no relayout) ----
    wemb = slab32_ref[S32_WEMB:S32_WEMB + VOCAB_PAD, :]    # (128, 32)
    wo = slab32_ref[S32_WO:S32_WO + HIDDEN, :]             # (32, 32)
    w2 = slab32_ref[S32_W2:S32_W2 + FFN, :]                # (128, 32)
    wp = slab32_ref[S32_WP:S32_WP + HIDDEN, :]             # (32, 32)

    wqkv = slab128_ref[S128_WQKV:S128_WQKV + HIDDEN, :]    # (32, 128)
    w1 = slab128_ref[S128_W1:S128_W1 + HIDDEN, :]          # (32, 128)
    wc = slab128_ref[S128_WC:S128_WC + HIDDEN, :]          # (32, 128)

    # ---- embeddings: one-hot (rows, 128) @ (128, HIDDEN) on the MXU ----
    ids_col = ids_ref[...]                                             # (rows, 1) int32
    vocab_iota = jax.lax.broadcasted_iota(jnp.int32, (rows, VOCAB_PAD), 1)
    onehot = (vocab_iota == ids_col).astype(bf16)
    x = jnp.dot(onehot, wemb, preferred_element_type=f32)              # (rows, 32)
    x = x + jnp.concatenate([pemb] * batch, axis=0)                    # broadcast pos-emb over batch
    x = _layer_norm(x, lne_g, lne_b)                                   # (rows, 32) f32

    # ---- fused QKV projection: single (rows,32)x(32,128) matmul ----
    qkv = jnp.dot(x.astype(bf16), wqkv, preferred_element_type=f32) + bqkv  # (rows, 128)
    qkv_bf = qkv.astype(bf16)                                          # cast once, slice per head

    # ---- attention bias over the flattened (batch*SEQ) key axis:
    #      key-padding bias + cross-batch block mask (XOR trick: two indices
    #      share a SEQ-aligned power-of-two block iff (i ^ j) < SEQ). ----
    key_bias = (1.0 - mask_ref[...]) * (-1e9)                          # (1, rows)
    qi = jax.lax.broadcasted_iota(jnp.int32, (rows, rows), 0)
    ki = jax.lax.broadcasted_iota(jnp.int32, (rows, rows), 1)
    same_batch = (qi ^ ki) < SEQ
    bias = jnp.where(same_batch, 0.0, -1e9) + key_bias                 # (rows, rows) f32

    scale = 1.0 / math.sqrt(HEAD_DIM)
    dn_qk = (((1,), (1,)), ((), ()))     # contract last dims (q @ k^T), no batch dims

    # ---- multi-head attention over flat rows: 2 small matmuls per head,
    #      no q/k/v 3-D reshapes, head contexts stay in vregs ----
    ctx_heads = []
    for h in range(HEADS):
        lo = h * HEAD_DIM
        qh = qkv_bf[:, lo:lo + HEAD_DIM]                               # (rows, 8)
        kh = qkv_bf[:, HIDDEN + lo:HIDDEN + lo + HEAD_DIM]             # (rows, 8)
        vh = qkv_bf[:, 2 * HIDDEN + lo:2 * HIDDEN + lo + HEAD_DIM]     # (rows, 8)
        s = jax.lax.dot_general(qh, kh, dn_qk,
                                preferred_element_type=f32) * scale + bias   # (rows, rows)
        s = s - jnp.max(s, axis=-1, keepdims=True)
        p = jnp.exp(s)
        p = p * pl.reciprocal(jnp.sum(p, axis=-1, keepdims=True), approx=True)
        ctx_heads.append(jnp.dot(p.astype(bf16), vh,
                                 preferred_element_type=f32))          # (rows, 8)
    ctx = jnp.concatenate(ctx_heads, axis=-1)                          # (rows, 32)

    attn = jnp.dot(ctx.astype(bf16), wo, preferred_element_type=f32) + bo
    x = _layer_norm(x + attn, ln1_g, ln1_b)

    # ---- feed forward ----
    mid = jnp.dot(x.astype(bf16), w1, preferred_element_type=f32) + b1       # (rows, 128)
    # TODO(synk): PyTorch nn.GELU defaults to exact erf; tanh approximation used here.
    mid = jax.nn.gelu(mid)
    ff = jnp.dot(mid.astype(bf16), w2, preferred_element_type=f32) + b2
    x = _layer_norm(x + ff, ln2_g, ln2_b)                              # (rows, 32)

    # hidden states stay flat; wrapper reshapes to (batch, SEQ, HIDDEN) for free
    hid_ref[...] = x

    # ---- pooler (tanh dense on [CLS]) + classifier (dropout = identity, eval) ----
    cls = jnp.concatenate([x[b * SEQ:b * SEQ + 1, :] for b in range(batch)],
                          axis=0)                                      # (batch, 32)
    pooled = jnp.tanh(jnp.dot(cls.astype(bf16), wp,
                              preferred_element_type=f32) + bp)
    pool_ref[...] = pooled
    # lane-dense (batch, 128) logits store; padded lanes are exactly zero
    logits_ref[...] = jnp.dot(pooled.astype(bf16), wc,
                              preferred_element_type=f32) + bc


# ---------------------------------------------------------------------------
# Parameter init (PyTorch-like layout) and one-time packing
# ---------------------------------------------------------------------------
def init_params(key):
    ks = jax.random.split(key, 12)
    n = lambda k, s: (jax.random.normal(k, s, jnp.float32) * 0.02)
    zeros = lambda s: jnp.zeros(s, jnp.float32)
    ones = lambda s: jnp.ones(s, jnp.float32)
    return dict(
        wemb=n(ks[0], (VOCAB, HIDDEN)), pemb=n(ks[1], (SEQ, HIDDEN)),
        lne_g=ones((1, HIDDEN)), lne_b=zeros((1, HIDDEN)),
        wq=n(ks[2], (HIDDEN, HIDDEN)), bq=zeros((1, HIDDEN)),
        wk=n(ks[3], (HIDDEN, HIDDEN)), bk=zeros((1, HIDDEN)),
        wv=n(ks[4], (HIDDEN, HIDDEN)), bv=zeros((1, HIDDEN)),
        wo=n(ks[5], (HIDDEN, HIDDEN)), bo=zeros((1, HIDDEN)),
        ln1_g=ones((1, HIDDEN)), ln1_b=zeros((1, HIDDEN)),
        w1=n(ks[6], (HIDDEN, FFN)), b1=zeros((1, FFN)),
        w2=n(ks[7], (FFN, HIDDEN)), b2=zeros((1, HIDDEN)),
        ln2_g=ones((1, HIDDEN)), ln2_b=zeros((1, HIDDEN)),
        wp=n(ks[8], (HIDDEN, HIDDEN)), bp=zeros((1, HIDDEN)),
        wc=n(ks[9], (HIDDEN, NUM_CLASSES)), bc=zeros((1, NUM_CLASSES)),
    )


def pack_params(params):
    """One-time packing / padding / bf16 casting -> kernel-ready pytree.

    Called once at init so NONE of this work sits on the per-forward path.
    """
    bf16 = jnp.bfloat16

    # 32-column bf16 slab: wemb(128)|wo(32)|w2(128)|wp(32) row-stacked -> (320, 32)
    wemb_pad = jnp.zeros((VOCAB_PAD, HIDDEN), jnp.float32).at[:VOCAB].set(params['wemb'])
    slab32 = jnp.concatenate(
        [wemb_pad, params['wo'], params['w2'], params['wp']], axis=0).astype(bf16)

    # 128-column bf16 slab: wqkv(32)|w1(32)|wc_pad(32) row-stacked -> (96, 128)
    wqkv_pad = jnp.zeros((HIDDEN, LANES), jnp.float32).at[:, :3 * HIDDEN].set(
        jnp.concatenate([params['wq'], params['wk'], params['wv']], axis=1))
    wc_pad = jnp.zeros((HIDDEN, LANES), jnp.float32).at[:, :NUM_CLASSES].set(params['wc'])
    slab128 = jnp.concatenate([wqkv_pad, params['w1'], wc_pad], axis=0).astype(bf16)

    def row(v):
        return jnp.zeros((1, LANES), jnp.float32).at[:, :v.shape[-1]].set(v.reshape(1, -1))

    pemb_rows = jnp.zeros((SEQ, LANES), jnp.float32).at[:, :HIDDEN].set(params['pemb'])
    vec = jnp.concatenate([
        pemb_rows,                                                     # rows 0:SEQ
        row(params['lne_g']), row(params['lne_b']),
        row(jnp.concatenate([params['bq'], params['bk'], params['bv']], axis=1)),
        row(params['bo']),
        row(params['ln1_g']), row(params['ln1_b']),
        row(params['b1']), row(params['b2']),
        row(params['ln2_g']), row(params['ln2_b']),
        row(params['bp']), row(params['bc']),
    ], axis=0)                                                         # (20, 128) f32
    assert vec.shape == (VEC_ROWS, LANES)
    assert slab32.shape == (S32_ROWS, HIDDEN)
    assert slab128.shape == (S128_ROWS, LANES)

    return dict(slab32=slab32, slab128=slab128, vec=vec)


# ---------------------------------------------------------------------------
# Forward wrapper (per-call path: only ids/mask reshape + kernel + cheap views)
# ---------------------------------------------------------------------------
@jax.jit
def speaker_classifier_forward(packed, input_ids, attention_mask):
    """Returns (hidden_states, pooler, logits) like the PyTorch module."""
    batch, seq = input_ids.shape
    assert seq == SEQ
    rows = batch * seq

    ids2d = input_ids.astype(jnp.int32).reshape(rows, 1)
    mask_row = attention_mask.astype(jnp.float32).reshape(1, rows)

    hid_flat, pooled, logits_pad = pl.pallas_call(
        fused_kernel,
        out_shape=(jax.ShapeDtypeStruct((rows, HIDDEN), jnp.float32),
                   jax.ShapeDtypeStruct((batch, HIDDEN), jnp.float32),
                   jax.ShapeDtypeStruct((batch, LANES), jnp.float32)),
    )(ids2d, mask_row, packed['slab32'], packed['slab128'], packed['vec'])

    hidden_states = hid_flat.reshape(batch, seq, HIDDEN)   # free reshape in XLA
    logits = logits_pad[:, :NUM_CLASSES]
    return hidden_states, pooled, logits


if __name__ == "__main__":
    key = jax.random.PRNGKey(0)
    k_param, k_ids = jax.random.split(key)

    params = init_params(k_param)
    packed = pack_params(params)        # hoisted out of the per-call path

    input_ids = jax.random.randint(k_ids, (BATCH, SEQ), 0, VOCAB, dtype=jnp.int32)
    attention_mask = jnp.ones((BATCH, SEQ), jnp.float32).at[1, -2:].set(0.0)

    hidden_states, pooler, logits = jax.block_until_ready(
        speaker_classifier_forward(packed, input_ids, attention_mask))

    assert hidden_states.shape == (BATCH, SEQ, HIDDEN)
    assert pooler.shape == (BATCH, HIDDEN)
    assert logits.shape == (BATCH, NUM_CLASSES)
    assert bool(jnp.all(jnp.isfinite(hidden_states)))
    assert bool(jnp.all(jnp.isfinite(pooler)))
    assert bool(jnp.all(jnp.isfinite(logits)))
    print("KERNEL_OK")
</pallas_src>

<mosaic_0001>
module attributes {stable_mosaic.version = 11 : i64} {
  func.func @fused_kernel(%arg0: memref<16x1xi32, #tpu.memory_space<vmem>>, %arg1: memref<1x16xf32, #tpu.memory_space<vmem>>, %arg2: memref<320x32xbf16, #tpu.memory_space<vmem>>, %arg3: memref<96x128xbf16, #tpu.memory_space<vmem>>, %arg4: memref<20x128xf32, #tpu.memory_space<vmem>>, %arg5: memref<16x32xf32, #tpu.memory_space<vmem>>, %arg6: memref<2x32xf32, #tpu.memory_space<vmem>>, %arg7: memref<2x128xf32, #tpu.memory_space<vmem>>) attributes {dimension_semantics = [], scalar_prefetch = 0 : i64, scratch_operands = 0 : i64, tpu.core_type = #tpu.core_type<tc>} {
    %c0 = arith.constant 0 : index
    %c0_0 = arith.constant 0 : index
    %0 = vector.load %arg4[%c0, %c0_0] : memref<20x128xf32, #tpu.memory_space<vmem>>, vector<8x32xf32>
    %c8 = arith.constant 8 : index
    %c0_1 = arith.constant 0 : index
    %1 = vector.load %arg4[%c8, %c0_1] : memref<20x128xf32, #tpu.memory_space<vmem>>, vector<1x32xf32>
    %c9 = arith.constant 9 : index
    %c0_2 = arith.constant 0 : index
    %2 = vector.load %arg4[%c9, %c0_2] : memref<20x128xf32, #tpu.memory_space<vmem>>, vector<1x32xf32>
    %c10 = arith.constant 10 : index
    %c0_3 = arith.constant 0 : index
    %3 = vector.load %arg4[%c10, %c0_3] : memref<20x128xf32, #tpu.memory_space<vmem>>, vector<1x128xf32>
    %c11 = arith.constant 11 : index
    %c0_4 = arith.constant 0 : index
    %4 = vector.load %arg4[%c11, %c0_4] : memref<20x128xf32, #tpu.memory_space<vmem>>, vector<1x32xf32>
    %c12 = arith.constant 12 : index
    %c0_5 = arith.constant 0 : index
    %5 = vector.load %arg4[%c12, %c0_5] : memref<20x128xf32, #tpu.memory_space<vmem>>, vector<1x32xf32>
    %c13 = arith.constant 13 : index
    %c0_6 = arith.constant 0 : index
    %6 = vector.load %arg4[%c13, %c0_6] : memref<20x128xf32, #tpu.memory_space<vmem>>, vector<1x32xf32>
    %c14 = arith.constant 14 : index
    %c0_7 = arith.constant 0 : index
    %7 = vector.load %arg4[%c14, %c0_7] : memref<20x128xf32, #tpu.memory_space<vmem>>, vector<1x128xf32>
    %c15 = arith.constant 15 : index
    %c0_8 = arith.constant 0 : index
    %8 = vector.load %arg4[%c15, %c0_8] : memref<20x128xf32, #tpu.memory_space<vmem>>, vector<1x32xf32>
    %c16 = arith.constant 16 : index
    %c0_9 = arith.constant 0 : index
    %9 = vector.load %arg4[%c16, %c0_9] : memref<20x128xf32, #tpu.memory_space<vmem>>, vector<1x32xf32>
    %c17 = arith.constant 17 : index
    %c0_10 = arith.constant 0 : index
    %10 = vector.load %arg4[%c17, %c0_10] : memref<20x128xf32, #tpu.memory_space<vmem>>, vector<1x32xf32>
    %c18 = arith.constant 18 : index
    %c0_11 = arith.constant 0 : index
    %11 = vector.load %arg4[%c18, %c0_11] : memref<20x128xf32, #tpu.memory_space<vmem>>, vector<1x32xf32>
    %c19 = arith.constant 19 : index
    %c0_12 = arith.constant 0 : index
    %12 = vector.load %arg4[%c19, %c0_12] : memref<20x128xf32, #tpu.memory_space<vmem>>, vector<1x128xf32>
    %c0_13 = arith.constant 0 : index
    %c0_14 = arith.constant 0 : index
    %13 = vector.load %arg2[%c0_13, %c0_14] : memref<320x32xbf16, #tpu.memory_space<vmem>>, vector<128x32xbf16>
    %c128 = arith.constant 128 : index
    %c0_15 = arith.constant 0 : index
    %14 = vector.load %arg2[%c128, %c0_15] : memref<320x32xbf16, #tpu.memory_space<vmem>>, vector<32x32xbf16>
    %c160 = arith.constant 160 : index
    %c0_16 = arith.constant 0 : index
    %15 = vector.load %arg2[%c160, %c0_16] : memref<320x32xbf16, #tpu.memory_space<vmem>>, vector<128x32xbf16>
    %c288 = arith.constant 288 : index
    %c0_17 = arith.constant 0 : index
    %16 = vector.load %arg2[%c288, %c0_17] : memref<320x32xbf16, #tpu.memory_space<vmem>>, vector<32x32xbf16>
    %c0_18 = arith.constant 0 : index
    %c0_19 = arith.constant 0 : index
    %17 = vector.load %arg3[%c0_18, %c0_19] : memref<96x128xbf16, #tpu.memory_space<vmem>>, vector<32x128xbf16>
    %c32 = arith.constant 32 : index
    %c0_20 = arith.constant 0 : index
    %18 = vector.load %arg3[%c32, %c0_20] : memref<96x128xbf16, #tpu.memory_space<vmem>>, vector<32x128xbf16>
    %c64 = arith.constant 64 : index
    %c0_21 = arith.constant 0 : index
    %19 = vector.load %arg3[%c64, %c0_21] : memref<96x128xbf16, #tpu.memory_space<vmem>>, vector<32x128xbf16>
    %c0_22 = arith.constant 0 : index
    %c0_23 = arith.constant 0 : index
    %20 = vector.load %arg0[%c0_22, %c0_23] : memref<16x1xi32, #tpu.memory_space<vmem>>, vector<16x1xi32>
    %21 = tpu.iota {dimensions = array<i32: 1>} : vector<16x128xi32>
    %22 = vector.broadcast %20 : vector<16x1xi32> to vector<16x128xi32>
    %23 = arith.cmpi eq, %21, %22 : vector<16x128xi32>
    %24 = arith.extui %23 : vector<16x128xi1> to vector<16x128xi32>
    %25 = arith.sitofp %24 : vector<16x128xi32> to vector<16x128xf32>
    %26 = arith.truncf %25 : vector<16x128xf32> to vector<16x128xbf16>
    %cst = arith.constant dense<0.000000e+00> : vector<16x32xf32>
    %27 = tpu.matmul %26, %13, %cst {dimension_numbers = #tpu.dot_dimension_numbers<[1], [0], [0], [1], [0, 0, 1, 1], [], []>} : vector<16x128xbf16>, vector<128x32xbf16>, vector<16x32xf32> -> vector<16x32xf32>
    %28 = tpu.concatenate %0, %0 in 0 : vector<8x32xf32>, vector<8x32xf32> -> vector<16x32xf32>
    %29 = arith.addf %27, %28 : vector<16x32xf32>
    %cst_24 = arith.constant dense<0.000000e+00> : vector<16xf32>
    %30 = vector.multi_reduction <add>, %29, %cst_24 [1] : vector<16x32xf32> to vector<16xf32>
    %31 = vector.shape_cast %30 : vector<16xf32> to vector<16x1xf32>
    %cst_25 = arith.constant 3.200000e+01 : f32
    %32 = vector.broadcast %cst_25 : f32 to vector<16x1xf32>
    %33 = arith.divf %31, %32 : vector<16x1xf32>
    %34 = vector.broadcast %33 : vector<16x1xf32> to vector<16x32xf32>
    %35 = arith.subf %29, %34 : vector<16x32xf32>
    %36 = arith.mulf %35, %35 : vector<16x32xf32>
    %cst_26 = arith.constant dense<0.000000e+00> : vector<16xf32>
    %37 = vector.multi_reduction <add>, %36, %cst_26 [1] : vector<16x32xf32> to vector<16xf32>
    %38 = vector.shape_cast %37 : vector<16xf32> to vector<16x1xf32>
    %cst_27 = arith.constant 3.200000e+01 : f32
    %39 = vector.broadcast %cst_27 : f32 to vector<16x1xf32>
    %40 = arith.divf %38, %39 : vector<16x1xf32>
    %41 = vector.broadcast %33 : vector<16x1xf32> to vector<16x32xf32>
    %42 = arith.subf %29, %41 : vector<16x32xf32>
    %cst_28 = arith.constant 9.99999996E-13 : f32
    %43 = vector.broadcast %cst_28 : f32 to vector<16x1xf32>
    %44 = arith.addf %40, %43 : vector<16x1xf32>
    %45 = math.rsqrt %44 : vector<16x1xf32>
    %46 = vector.broadcast %45 : vector<16x1xf32> to vector<16x32xf32>
    %47 = arith.mulf %42, %46 : vector<16x32xf32>
    %48 = vector.broadcast %1 : vector<1x32xf32> to vector<16x32xf32>
    %49 = arith.mulf %47, %48 : vector<16x32xf32>
    %50 = vector.broadcast %2 : vector<1x32xf32> to vector<16x32xf32>
    %51 = arith.addf %49, %50 : vector<16x32xf32>
    %52 = arith.truncf %51 : vector<16x32xf32> to vector<16x32xbf16>
    %cst_29 = arith.constant dense<0.000000e+00> : vector<16x128xf32>
    %53 = tpu.matmul %52, %17, %cst_29 {dimension_numbers = #tpu.dot_dimension_numbers<[1], [0], [0], [1], [0, 0, 1, 1], [], []>} : vector<16x32xbf16>, vector<32x128xbf16>, vector<16x128xf32> -> vector<16x128xf32>
    %54 = vector.broadcast %3 : vector<1x128xf32> to vector<16x128xf32>
    %55 = arith.addf %53, %54 : vector<16x128xf32>
    %56 = arith.truncf %55 : vector<16x128xf32> to vector<16x128xbf16>
    %c0_30 = arith.constant 0 : index
    %c0_31 = arith.constant 0 : index
    %57 = vector.load %arg1[%c0_30, %c0_31] : memref<1x16xf32, #tpu.memory_space<vmem>>, vector<1x16xf32>
    %cst_32 = arith.constant 1.000000e+00 : f32
    %58 = vector.broadcast %cst_32 : f32 to vector<1x16xf32>
    %59 = arith.subf %58, %57 : vector<1x16xf32>
    %cst_33 = arith.constant -1.000000e+09 : f32
    %60 = vector.broadcast %cst_33 : f32 to vector<1x16xf32>
    %61 = arith.mulf %59, %60 : vector<1x16xf32>
    %62 = tpu.iota {dimensions = array<i32: 0>} : vector<16x16xi32>
    %63 = tpu.iota {dimensions = array<i32: 1>} : vector<16x16xi32>
    %64 = arith.xori %62, %63 : vector<16x16xi32>
    %c8_i32 = arith.constant 8 : i32
    %65 = vector.broadcast %c8_i32 : i32 to vector<16x16xi32>
    %66 = arith.cmpi slt, %64, %65 : vector<16x16xi32>
    %cst_34 = arith.constant 0.000000e+00 : f32
    %cst_35 = arith.constant -1.000000e+09 : f32
    %67 = vector.broadcast %cst_34 : f32 to vector<16x16xf32>
    %68 = vector.broadcast %cst_35 : f32 to vector<16x16xf32>
    %69 = arith.select %66, %67, %68 : vector<16x16xi1>, vector<16x16xf32>
    %70 = vector.broadcast %61 : vector<1x16xf32> to vector<16x16xf32>
    %71 = arith.addf %69, %70 : vector<16x16xf32>
    %72 = vector.extract_strided_slice %56 {offsets = [0, 0], sizes = [16, 8], strides = [1, 1]} : vector<16x128xbf16> to vector<16x8xbf16>
    %73 = vector.extract_strided_slice %56 {offsets = [0, 32], sizes = [16, 8], strides = [1, 1]} : vector<16x128xbf16> to vector<16x8xbf16>
    %74 = vector.extract_strided_slice %56 {offsets = [0, 64], sizes = [16, 8], strides = [1, 1]} : vector<16x128xbf16> to vector<16x8xbf16>
    %cst_36 = arith.constant dense<0.000000e+00> : vector<16x16xf32>
    %75 = tpu.matmul %72, %73, %cst_36 {dimension_numbers = #tpu.dot_dimension_numbers<[1], [1], [0], [0], [0, 0, 1, 0], [], []>} : vector<16x8xbf16>, vector<16x8xbf16>, vector<16x16xf32> -> vector<16x16xf32>
    %cst_37 = arith.constant 0.353553385 : f32
    %76 = vector.broadcast %cst_37 : f32 to vector<16x16xf32>
    %77 = arith.mulf %75, %76 : vector<16x16xf32>
    %78 = arith.addf %77, %71 : vector<16x16xf32>
    %cst_38 = arith.constant dense<0xFF800000> : vector<16xf32>
    %79 = vector.multi_reduction <maximumf>, %78, %cst_38 [1] : vector<16x16xf32> to vector<16xf32>
    %80 = vector.shape_cast %79 : vector<16xf32> to vector<16x1xf32>
    %81 = vector.broadcast %80 : vector<16x1xf32> to vector<16x16xf32>
    %82 = arith.subf %78, %81 : vector<16x16xf32>
    %83 = math.exp %82 : vector<16x16xf32>
    %cst_39 = arith.constant dense<0.000000e+00> : vector<16xf32>
    %84 = vector.multi_reduction <add>, %83, %cst_39 [1] : vector<16x16xf32> to vector<16xf32>
    %85 = vector.shape_cast %84 : vector<16xf32> to vector<16x1xf32>
    %86 = tpu.reciprocal %85 {approx = true} : vector<16x1xf32> -> vector<16x1xf32>
    %87 = vector.broadcast %86 : vector<16x1xf32> to vector<16x16xf32>
    %88 = arith.mulf %83, %87 : vector<16x16xf32>
    %89 = arith.truncf %88 : vector<16x16xf32> to vector<16x16xbf16>
    %cst_40 = arith.constant dense<0.000000e+00> : vector<16x8xf32>
    %90 = tpu.matmul %89, %74, %cst_40 {dimension_numbers = #tpu.dot_dimension_numbers<[1], [0], [0], [1], [0, 0, 1, 1], [], []>} : vector<16x16xbf16>, vector<16x8xbf16>, vector<16x8xf32> -> vector<16x8xf32>
    %91 = vector.extract_strided_slice %56 {offsets = [0, 8], sizes = [16, 8], strides = [1, 1]} : vector<16x128xbf16> to vector<16x8xbf16>
    %92 = vector.extract_strided_slice %56 {offsets = [0, 40], sizes = [16, 8], strides = [1, 1]} : vector<16x128xbf16> to vector<16x8xbf16>
    %93 = vector.extract_strided_slice %56 {offsets = [0, 72], sizes = [16, 8], strides = [1, 1]} : vector<16x128xbf16> to vector<16x8xbf16>
    %cst_41 = arith.constant dense<0.000000e+00> : vector<16x16xf32>
    %94 = tpu.matmul %91, %92, %cst_41 {dimension_numbers = #tpu.dot_dimension_numbers<[1], [1], [0], [0], [0, 0, 1, 0], [], []>} : vector<16x8xbf16>, vector<16x8xbf16>, vector<16x16xf32> -> vector<16x16xf32>
    %cst_42 = arith.constant 0.353553385 : f32
    %95 = vector.broadcast %cst_42 : f32 to vector<16x16xf32>
    %96 = arith.mulf %94, %95 : vector<16x16xf32>
    %97 = arith.addf %96, %71 : vector<16x16xf32>
    %cst_43 = arith.constant dense<0xFF800000> : vector<16xf32>
    %98 = vector.multi_reduction <maximumf>, %97, %cst_43 [1] : vector<16x16xf32> to vector<16xf32>
    %99 = vector.shape_cast %98 : vector<16xf32> to vector<16x1xf32>
    %100 = vector.broadcast %99 : vector<16x1xf32> to vector<16x16xf32>
    %101 = arith.subf %97, %100 : vector<16x16xf32>
    %102 = math.exp %101 : vector<16x16xf32>
    %cst_44 = arith.constant dense<0.000000e+00> : vector<16xf32>
    %103 = vector.multi_reduction <add>, %102, %cst_44 [1] : vector<16x16xf32> to vector<16xf32>
    %104 = vector.shape_cast %103 : vector<16xf32> to vector<16x1xf32>
    %105 = tpu.reciprocal %104 {approx = true} : vector<16x1xf32> -> vector<16x1xf32>
    %106 = vector.broadcast %105 : vector<16x1xf32> to vector<16x16xf32>
    %107 = arith.mulf %102, %106 : vector<16x16xf32>
    %108 = arith.truncf %107 : vector<16x16xf32> to vector<16x16xbf16>
    %cst_45 = arith.constant dense<0.000000e+00> : vector<16x8xf32>
    %109 = tpu.matmul %108, %93, %cst_45 {dimension_numbers = #tpu.dot_dimension_numbers<[1], [0], [0], [1], [0, 0, 1, 1], [], []>} : vector<16x16xbf16>, vector<16x8xbf16>, vector<16x8xf32> -> vector<16x8xf32>
    %110 = vector.extract_strided_slice %56 {offsets = [0, 16], sizes = [16, 8], strides = [1, 1]} : vector<16x128xbf16> to vector<16x8xbf16>
    %111 = vector.extract_strided_slice %56 {offsets = [0, 48], sizes = [16, 8], strides = [1, 1]} : vector<16x128xbf16> to vector<16x8xbf16>
    %112 = vector.extract_strided_slice %56 {offsets = [0, 80], sizes = [16, 8], strides = [1, 1]} : vector<16x128xbf16> to vector<16x8xbf16>
    %cst_46 = arith.constant dense<0.000000e+00> : vector<16x16xf32>
    %113 = tpu.matmul %110, %111, %cst_46 {dimension_numbers = #tpu.dot_dimension_numbers<[1], [1], [0], [0], [0, 0, 1, 0], [], []>} : vector<16x8xbf16>, vector<16x8xbf16>, vector<16x16xf32> -> vector<16x16xf32>
    %cst_47 = arith.constant 0.353553385 : f32
    %114 = vector.broadcast %cst_47 : f32 to vector<16x16xf32>
    %115 = arith.mulf %113, %114 : vector<16x16xf32>
    %116 = arith.addf %115, %71 : vector<16x16xf32>
    %cst_48 = arith.constant dense<0xFF800000> : vector<16xf32>
    %117 = vector.multi_reduction <maximumf>, %116, %cst_48 [1] : vector<16x16xf32> to vector<16xf32>
    %118 = vector.shape_cast %117 : vector<16xf32> to vector<16x1xf32>
    %119 = vector.broadcast %118 : vector<16x1xf32> to vector<16x16xf32>
    %120 = arith.subf %116, %119 : vector<16x16xf32>
    %121 = math.exp %120 : vector<16x16xf32>
    %cst_49 = arith.constant dense<0.000000e+00> : vector<16xf32>
    %122 = vector.multi_reduction <add>, %121, %cst_49 [1] : vector<16x16xf32> to vector<16xf32>
    %123 = vector.shape_cast %122 : vector<16xf32> to vector<16x1xf32>
    %124 = tpu.reciprocal %123 {approx = true} : vector<16x1xf32> -> vector<16x1xf32>
    %125 = vector.broadcast %124 : vector<16x1xf32> to vector<16x16xf32>
    %126 = arith.mulf %121, %125 : vector<16x16xf32>
    %127 = arith.truncf %126 : vector<16x16xf32> to vector<16x16xbf16>
    %cst_50 = arith.constant dense<0.000000e+00> : vector<16x8xf32>
    %128 = tpu.matmul %127, %112, %cst_50 {dimension_numbers = #tpu.dot_dimension_numbers<[1], [0], [0], [1], [0, 0, 1, 1], [], []>} : vector<16x16xbf16>, vector<16x8xbf16>, vector<16x8xf32> -> vector<16x8xf32>
    %129 = vector.extract_strided_slice %56 {offsets = [0, 24], sizes = [16, 8], strides = [1, 1]} : vector<16x128xbf16> to vector<16x8xbf16>
    %130 = vector.extract_strided_slice %56 {offsets = [0, 56], sizes = [16, 8], strides = [1, 1]} : vector<16x128xbf16> to vector<16x8xbf16>
    %131 = vector.extract_strided_slice %56 {offsets = [0, 88], sizes = [16, 8], strides = [1, 1]} : vector<16x128xbf16> to vector<16x8xbf16>
    %cst_51 = arith.constant dense<0.000000e+00> : vector<16x16xf32>
    %132 = tpu.matmul %129, %130, %cst_51 {dimension_numbers = #tpu.dot_dimension_numbers<[1], [1], [0], [0], [0, 0, 1, 0], [], []>} : vector<16x8xbf16>, vector<16x8xbf16>, vector<16x16xf32> -> vector<16x16xf32>
    %cst_52 = arith.constant 0.353553385 : f32
    %133 = vector.broadcast %cst_52 : f32 to vector<16x16xf32>
    %134 = arith.mulf %132, %133 : vector<16x16xf32>
    %135 = arith.addf %134, %71 : vector<16x16xf32>
    %cst_53 = arith.constant dense<0xFF800000> : vector<16xf32>
    %136 = vector.multi_reduction <maximumf>, %135, %cst_53 [1] : vector<16x16xf32> to vector<16xf32>
    %137 = vector.shape_cast %136 : vector<16xf32> to vector<16x1xf32>
    %138 = vector.broadcast %137 : vector<16x1xf32> to vector<16x16xf32>
    %139 = arith.subf %135, %138 : vector<16x16xf32>
    %140 = math.exp %139 : vector<16x16xf32>
    %cst_54 = arith.constant dense<0.000000e+00> : vector<16xf32>
    %141 = vector.multi_reduction <add>, %140, %cst_54 [1] : vector<16x16xf32> to vector<16xf32>
    %142 = vector.shape_cast %141 : vector<16xf32> to vector<16x1xf32>
    %143 = tpu.reciprocal %142 {approx = true} : vector<16x1xf32> -> vector<16x1xf32>
    %144 = vector.broadcast %143 : vector<16x1xf32> to vector<16x16xf32>
    %145 = arith.mulf %140, %144 : vector<16x16xf32>
    %146 = arith.truncf %145 : vector<16x16xf32> to vector<16x16xbf16>
    %cst_55 = arith.constant dense<0.000000e+00> : vector<16x8xf32>
    %147 = tpu.matmul %146, %131, %cst_55 {dimension_numbers = #tpu.dot_dimension_numbers<[1], [0], [0], [1], [0, 0, 1, 1], [], []>} : vector<16x16xbf16>, vector<16x8xbf16>, vector<16x8xf32> -> vector<16x8xf32>
    %148 = tpu.concatenate %90, %109, %128, %147 in 1 : vector<16x8xf32>, vector<16x8xf32>, vector<16x8xf32>, vector<16x8xf32> -> vector<16x32xf32>
    %149 = arith.truncf %148 : vector<16x32xf32> to vector<16x32xbf16>
    %cst_56 = arith.constant dense<0.000000e+00> : vector<16x32xf32>
    %150 = tpu.matmul %149, %14, %cst_56 {dimension_numbers = #tpu.dot_dimension_numbers<[1], [0], [0], [1], [0, 0, 1, 1], [], []>} : vector<16x32xbf16>, vector<32x32xbf16>, vector<16x32xf32> -> vector<16x32xf32>
    %151 = vector.broadcast %4 : vector<1x32xf32> to vector<16x32xf32>
    %152 = arith.addf %150, %151 : vector<16x32xf32>
    %153 = arith.addf %51, %152 : vector<16x32xf32>
    %cst_57 = arith.constant dense<0.000000e+00> : vector<16xf32>
    %154 = vector.multi_reduction <add>, %153, %cst_57 [1] : vector<16x32xf32> to vector<16xf32>
    %155 = vector.shape_cast %154 : vector<16xf32> to vector<16x1xf32>
    %cst_58 = arith.constant 3.200000e+01 : f32
    %156 = vector.broadcast %cst_58 : f32 to vector<16x1xf32>
    %157 = arith.divf %155, %156 : vector<16x1xf32>
    %158 = vector.broadcast %157 : vector<16x1xf32> to vector<16x32xf32>
    %159 = arith.subf %153, %158 : vector<16x32xf32>
    %160 = arith.mulf %159, %159 : vector<16x32xf32>
    %cst_59 = arith.constant dense<0.000000e+00> : vector<16xf32>
    %161 = vector.multi_reduction <add>, %160, %cst_59 [1] : vector<16x32xf32> to vector<16xf32>
    %162 = vector.shape_cast %161 : vector<16xf32> to vector<16x1xf32>
    %cst_60 = arith.constant 3.200000e+01 : f32
    %163 = vector.broadcast %cst_60 : f32 to vector<16x1xf32>
    %164 = arith.divf %162, %163 : vector<16x1xf32>
    %165 = vector.broadcast %157 : vector<16x1xf32> to vector<16x32xf32>
    %166 = arith.subf %153, %165 : vector<16x32xf32>
    %cst_61 = arith.constant 9.99999996E-13 : f32
    %167 = vector.broadcast %cst_61 : f32 to vector<16x1xf32>
    %168 = arith.addf %164, %167 : vector<16x1xf32>
    %169 = math.rsqrt %168 : vector<16x1xf32>
    %170 = vector.broadcast %169 : vector<16x1xf32> to vector<16x32xf32>
    %171 = arith.mulf %166, %170 : vector<16x32xf32>
    %172 = vector.broadcast %5 : vector<1x32xf32> to vector<16x32xf32>
    %173 = arith.mulf %171, %172 : vector<16x32xf32>
    %174 = vector.broadcast %6 : vector<1x32xf32> to vector<16x32xf32>
    %175 = arith.addf %173, %174 : vector<16x32xf32>
    %176 = arith.truncf %175 : vector<16x32xf32> to vector<16x32xbf16>
    %cst_62 = arith.constant dense<0.000000e+00> : vector<16x128xf32>
    %177 = tpu.matmul %176, %18, %cst_62 {dimension_numbers = #tpu.dot_dimension_numbers<[1], [0], [0], [1], [0, 0, 1, 1], [], []>} : vector<16x32xbf16>, vector<32x128xbf16>, vector<16x128xf32> -> vector<16x128xf32>
    %178 = vector.broadcast %7 : vector<1x128xf32> to vector<16x128xf32>
    %179 = arith.addf %177, %178 : vector<16x128xf32>
    %180 = arith.mulf %179, %179 : vector<16x128xf32>
    %181 = arith.mulf %179, %180 : vector<16x128xf32>
    %cst_63 = arith.constant 4.471500e-02 : f32
    %182 = vector.broadcast %cst_63 : f32 to vector<16x128xf32>
    %183 = arith.mulf %182, %181 : vector<16x128xf32>
    %184 = arith.addf %179, %183 : vector<16x128xf32>
    %cst_64 = arith.constant 0.797884583 : f32
    %185 = vector.broadcast %cst_64 : f32 to vector<16x128xf32>
    %186 = arith.mulf %185, %184 : vector<16x128xf32>
    %187 = math.tanh %186 : vector<16x128xf32>
    %cst_65 = arith.constant 1.000000e+00 : f32
    %188 = vector.broadcast %cst_65 : f32 to vector<16x128xf32>
    %189 = arith.addf %188, %187 : vector<16x128xf32>
    %cst_66 = arith.constant 5.000000e-01 : f32
    %190 = vector.broadcast %cst_66 : f32 to vector<16x128xf32>
    %191 = arith.mulf %190, %189 : vector<16x128xf32>
    %192 = arith.mulf %179, %191 : vector<16x128xf32>
    %193 = arith.truncf %192 : vector<16x128xf32> to vector<16x128xbf16>
    %cst_67 = arith.constant dense<0.000000e+00> : vector<16x32xf32>
    %194 = tpu.matmul %193, %15, %cst_67 {dimension_numbers = #tpu.dot_dimension_numbers<[1], [0], [0], [1], [0, 0, 1, 1], [], []>} : vector<16x128xbf16>, vector<128x32xbf16>, vector<16x32xf32> -> vector<16x32xf32>
    %195 = vector.broadcast %8 : vector<1x32xf32> to vector<16x32xf32>
    %196 = arith.addf %194, %195 : vector<16x32xf32>
    %197 = arith.addf %175, %196 : vector<16x32xf32>
    %cst_68 = arith.constant dense<0.000000e+00> : vector<16xf32>
    %198 = vector.multi_reduction <add>, %197, %cst_68 [1] : vector<16x32xf32> to vector<16xf32>
    %199 = vector.shape_cast %198 : vector<16xf32> to vector<16x1xf32>
    %cst_69 = arith.constant 3.200000e+01 : f32
    %200 = vector.broadcast %cst_69 : f32 to vector<16x1xf32>
    %201 = arith.divf %199, %200 : vector<16x1xf32>
    %202 = vector.broadcast %201 : vector<16x1xf32> to vector<16x32xf32>
    %203 = arith.subf %197, %202 : vector<16x32xf32>
    %204 = arith.mulf %203, %203 : vector<16x32xf32>
    %cst_70 = arith.constant dense<0.000000e+00> : vector<16xf32>
    %205 = vector.multi_reduction <add>, %204, %cst_70 [1] : vector<16x32xf32> to vector<16xf32>
    %206 = vector.shape_cast %205 : vector<16xf32> to vector<16x1xf32>
    %cst_71 = arith.constant 3.200000e+01 : f32
    %207 = vector.broadcast %cst_71 : f32 to vector<16x1xf32>
    %208 = arith.divf %206, %207 : vector<16x1xf32>
    %209 = vector.broadcast %201 : vector<16x1xf32> to vector<16x32xf32>
    %210 = arith.subf %197, %209 : vector<16x32xf32>
    %cst_72 = arith.constant 9.99999996E-13 : f32
    %211 = vector.broadcast %cst_72 : f32 to vector<16x1xf32>
    %212 = arith.addf %208, %211 : vector<16x1xf32>
    %213 = math.rsqrt %212 : vector<16x1xf32>
    %214 = vector.broadcast %213 : vector<16x1xf32> to vector<16x32xf32>
    %215 = arith.mulf %210, %214 : vector<16x32xf32>
    %216 = vector.broadcast %9 : vector<1x32xf32> to vector<16x32xf32>
    %217 = arith.mulf %215, %216 : vector<16x32xf32>
    %218 = vector.broadcast %10 : vector<1x32xf32> to vector<16x32xf32>
    %219 = arith.addf %217, %218 : vector<16x32xf32>
    %c0_73 = arith.constant 0 : index
    %c0_74 = arith.constant 0 : index
    %220 = vector.load %arg5[%c0_73, %c0_74] : memref<16x32xf32, #tpu.memory_space<vmem>>, vector<16x32xf32>
    tpu.vector_store %arg5[%c0_73, %c0_74], %219 {strides = array<i32>} : memref<16x32xf32, #tpu.memory_space<vmem>>, vector<16x32xf32>,
    %221 = vector.extract_strided_slice %219 {offsets = [0, 0], sizes = [1, 32], strides = [1, 1]} : vector<16x32xf32> to vector<1x32xf32>
    %222 = vector.extract_strided_slice %219 {offsets = [8, 0], sizes = [1, 32], strides = [1, 1]} : vector<16x32xf32> to vector<1x32xf32>
    %223 = tpu.concatenate %221, %222 in 0 : vector<1x32xf32>, vector<1x32xf32> -> vector<2x32xf32>
    %224 = arith.truncf %223 : vector<2x32xf32> to vector<2x32xbf16>
    %cst_75 = arith.constant dense<0.000000e+00> : vector<2x32xf32>
    %225 = tpu.matmul %224, %16, %cst_75 {dimension_numbers = #tpu.dot_dimension_numbers<[1], [0], [0], [1], [0, 0, 1, 1], [], []>} : vector<2x32xbf16>, vector<32x32xbf16>, vector<2x32xf32> -> vector<2x32xf32>
    %226 = vector.broadcast %11 : vector<1x32xf32> to vector<2x32xf32>
    %227 = arith.addf %225, %226 : vector<2x32xf32>
    %228 = math.tanh %227 : vector<2x32xf32>
    %c0_76 = arith.constant 0 : index
    %c0_77 = arith.constant 0 : index
    %229 = vector.load %arg6[%c0_76, %c0_77] : memref<2x32xf32, #tpu.memory_space<vmem>>, vector<2x32xf32>
    tpu.vector_store %arg6[%c0_76, %c0_77], %228 {strides = array<i32>} : memref<2x32xf32, #tpu.memory_space<vmem>>, vector<2x32xf32>,
    %230 = arith.truncf %228 : vector<2x32xf32> to vector<2x32xbf16>
    %cst_78 = arith.constant dense<0.000000e+00> : vector<2x128xf32>
    %231 = tpu.matmul %230, %19, %cst_78 {dimension_numbers = #tpu.dot_dimension_numbers<[1], [0], [0], [1], [0, 0, 1, 1], [], []>} : vector<2x32xbf16>, vector<32x128xbf16>, vector<2x128xf32> -> vector<2x128xf32>
    %232 = vector.broadcast %12 : vector<1x128xf32> to vector<2x128xf32>
    %233 = arith.addf %231, %232 : vector<2x128xf32>
    %c0_79 = arith.constant 0 : index
    %c0_80 = arith.constant 0 : index
    %234 = vector.load %arg7[%c0_79, %c0_80] : memref<2x128xf32, #tpu.memory_space<vmem>>, vector<2x128xf32>
    tpu.vector_store %arg7[%c0_79, %c0_80], %233 {strides = array<i32>} : memref<2x128xf32, #tpu.memory_space<vmem>>, vector<2x128xf32>,
    return
  }
}

</mosaic_0001>

<llo_original>
// kernel: speaker_classifier_forward.1
$region0: #{speaker_classifier_forward.1}
  #allocation0 [shape = 'u32[]', space=smem, size = 0x4, offset = 0x4, fixed_abs, tag = 'smem constant byte address 0x4 - core index']
  #allocation1 [shape = 'u32[144,128]{1,0:T(1,128)}', space=vmem, size = 0x12000, scoped, tag = 'internal scratch']
  %s0 = inlined_call_operand.vmem [shape: s32[16,1], index: 0, kind: input, shape index: {}]
  %s1 = inlined_call_operand.vmem [shape: f32[1,16], index: 1, kind: input, shape index: {}]
  %s2 = inlined_call_operand.vmem [shape: bf16[320,32], index: 2, kind: input, shape index: {}]
  %s3 = inlined_call_operand.vmem [shape: bf16[96,128], index: 3, kind: input, shape index: {}]
  %s4 = inlined_call_operand.vmem [shape: f32[20,128], index: 4, kind: input, shape index: {}]
  %s5 = inlined_call_operand.hbm [shape: f32[16,32], index: 5, kind: output, shape index: {0}]
  %s6 = inlined_call_operand.hbm [shape: f32[2,32], index: 6, kind: output, shape index: {1}]
  %s7 = inlined_call_operand.hbm [shape: f32[2,128], index: 7, kind: output, shape index: {2}]
  %8 = xla_tuple %s5, %s6, %s7
  %s9 = sld [smem:[#allocation0]]
  $region46: #{speaker_classifier_forward.1} parent=0
    _
  %s11 = ssub.s32 1, %s9
  %s12 = scalar_select 0, %s11, %s9
  $region1: #{speaker_classifier_forward.1} parent=0
    #allocation2 [shape = 'u8[8192]{0}', space=vmem, size = 0x2000, scoped, tag = 'output window, operand 0, single buffered']
    #allocation3 [shape = 's32[1]{0}', space=sflag, size = 0x4, scoped, tag = 'scoped memory for speaker_classifier_forward.1']
    #allocation4 [shape = 'u8[1024]{0}', space=vmem, size = 0x400, scoped, tag = 'output window, operand 1, single buffered']
    #allocation5 [shape = 's32[1]{0}', space=sflag, size = 0x4, scoped, tag = 'scoped memory for speaker_classifier_forward.1']
    #allocation6 [shape = 'u8[1024]{0}', space=vmem, size = 0x400, scoped, tag = 'output window, operand 2, single buffered']
    %13 = vsyncpa [#allocation3], 0
    %14 = vsyncpa [#allocation5], 0
    // Predicated region
    $region2: #{speaker_classifier_forward.1} parent=1 // pred_check
      _
    $region3: #{speaker_classifier_forward.1} parent=1 // pred_check_branch
      %16 = sbr.rel (0) target = $region5
    $region4: #{speaker_classifier_forward.1} parent=1 // pred_region
      _
    $region5: #{speaker_classifier_forward.1} parent=1 // pred_fallthru
      _
    // Predicated region
    $region6: #{speaker_classifier_forward.1} parent=1 // pred_check
      _
    $region7: #{speaker_classifier_forward.1} parent=1 // pred_check_branch
      %18 = sbr.rel (0) target = $region9
    $region8: #{speaker_classifier_forward.1} parent=1 // pred_region
      _
    $region9: #{speaker_classifier_forward.1} parent=1 // pred_fallthru
      _
    // Predicated region
    $region10: #{speaker_classifier_forward.1} parent=1 // pred_check
      _
    $region11: #{speaker_classifier_forward.1} parent=1 // pred_check_branch
      %20 = sbr.rel (0) target = $region13
    $region12: #{speaker_classifier_forward.1} parent=1 // pred_region
      _
    $region13: #{speaker_classifier_forward.1} parent=1 // pred_fallthru
      _
    // Predicated region
    $region14: #{speaker_classifier_forward.1} parent=1 // pred_check
      _
    $region15: #{speaker_classifier_forward.1} parent=1 // pred_check_branch
      %22 = sbr.rel (0) target = $region17
    $region16: #{speaker_classifier_forward.1} parent=1 // pred_region
      _
    $region17: #{speaker_classifier_forward.1} parent=1 // pred_fallthru
      _
    // Predicated region
    $region18: #{speaker_classifier_forward.1} parent=1 // pred_check
      _
    $region19: #{speaker_classifier_forward.1} parent=1 // pred_check_branch
      %24 = sbr.rel (0) target = $region21
    $region20: #{speaker_classifier_forward.1} parent=1 // pred_region
      _
    $region21: #{speaker_classifier_forward.1} parent=1 // pred_fallthru
      _
    %v26 = vld [vmem:[%s4] sm:$0xff]
    %v27 = vld [vmem:[%s4 + $0x8] sm:$0x1]
    %v28 = vld [vmem:[%s4 + $0x9] sm:$0x1]
    %v29 = vld [vmem:[%s4 + $0xa] sm:$0x1]
    %v30 = vld [vmem:[%s4 + $0xb] sm:$0x1]
    %v31 = vld [vmem:[%s4 + $0xc] sm:$0x1]
    %v32 = vld [vmem:[%s4 + $0xd] sm:$0x1]
    %v33 = vld [vmem:[%s4 + $0xe] sm:$0x1]
    %v34 = vld [vmem:[%s4 + $0xf] sm:$0x1]
    %v35 = vld [vmem:[%s4 + $0x10] sm:$0x1]
    %v36 = vld [vmem:[%s4 + $0x11] sm:$0x1]
    %v37 = vld [vmem:[%s4 + $0x12] sm:$0x1]
    %v38 = vld [vmem:[%s4 + $0x13] sm:$0x1]
    %v39 = vld [vmem:[%s2] sm:$0xf]
    %v40 = vld [vmem:[%s2 + $0x4] sm:$0xf]
    %v41 = vld [vmem:[%s2 + $0x8] sm:$0xf]
    %v42 = vld [vmem:[%s2 + $0xc] sm:$0xf]
    %v43 = vld [vmem:[%s2 + $0x10] sm:$0xf]
    %v44 = vld [vmem:[%s2 + $0x14] sm:$0xf]
    %v45 = vld [vmem:[%s2 + $0x18] sm:$0xf]
    %v46 = vld [vmem:[%s2 + $0x1c] sm:$0xf]
    %v47 = vld [vmem:[%s2 + $0x20] sm:$0xf]
    %v48 = vld [vmem:[%s2 + $0x24] sm:$0xf]
    %v49 = vld [vmem:[%s2 + $0x28] sm:$0xf]
    %v50 = vld [vmem:[%s2 + $0x2c] sm:$0xf]
    %v51 = vld [vmem:[%s2 + $0x30] sm:$0xf]
    %v52 = vld [vmem:[%s2 + $0x34] sm:$0xf]
    %v53 = vld [vmem:[%s2 + $0x38] sm:$0xf]
    %v54 = vld [vmem:[%s2 + $0x3c] sm:$0xf]
    %v55 = vld [vmem:[%s2 + $0x40] sm:$0xf]
    %v56 = vld [vmem:[%s2 + $0x44] sm:$0xf]
    %v57 = vld [vmem:[%s2 + $0x48] sm:$0xf]
    %v58 = vld [vmem:[%s2 + $0x4c] sm:$0xf]
    %v59 = vld [vmem:[%s2 + $0x50] sm:$0xf]
    %v60 = vld [vmem:[%s2 + $0x54] sm:$0xf]
    %v61 = vld [vmem:[%s2 + $0x58] sm:$0xf]
    %v62 = vld [vmem:[%s2 + $0x5c] sm:$0xf]
    %v63 = vld [vmem:[%s2 + $0x60] sm:$0xf]
    %v64 = vld [vmem:[%s2 + $0x64] sm:$0xf]
    %v65 = vld [vmem:[%s2 + $0x68] sm:$0xf]
    %v66 = vld [vmem:[%s2 + $0x6c] sm:$0xf]
    %v67 = vld [vmem:[%s2 + $0x70] sm:$0xf]
    %v68 = vld [vmem:[%s2 + $0x74] sm:$0xf]
    %v69 = vld [vmem:[%s2 + $0x78] sm:$0xf]
    %v70 = vld [vmem:[%s2 + $0x7c] sm:$0xf]
    %v71 = vld [vmem:[%s2 + $0x80] sm:$0xf]
    %v72 = vld [vmem:[%s2 + $0x84] sm:$0xf]
    %v73 = vld [vmem:[%s2 + $0x88] sm:$0xf]
    %v74 = vld [vmem:[%s2 + $0x8c] sm:$0xf]
    %v75 = vld [vmem:[%s2 + $0x90] sm:$0xf]
    %v76 = vld [vmem:[%s2 + $0x94] sm:$0xf]
    %v77 = vld [vmem:[%s2 + $0x98] sm:$0xf]
    %v78 = vld [vmem:[%s2 + $0x9c] sm:$0xf]
    %v79 = vld [vmem:[%s3] sm:$0xf]
    %v80 = vld [vmem:[%s3 + $0x4] sm:$0xf]
    %v81 = vld [vmem:[%s3 + $0x8] sm:$0xf]
    %v82 = vld [vmem:[%s3 + $0xc] sm:$0xf]
    %v83 = vld [vmem:[%s3 + $0x10] sm:$0xf]
    %v84 = vld [vmem:[%s3 + $0x14] sm:$0xf]
    %v85 = vld [vmem:[%s3 + $0x18] sm:$0xf]
    %v86 = vld [vmem:[%s3 + $0x1c] sm:$0xf]
    %v87 = vld [vmem:[%s3 + $0x20] sm:$0xf]
    %v88 = vld [vmem:[%s3 + $0x24] sm:$0xf]
    %v89 = vld [vmem:[%s3 + $0x28] sm:$0xf]
    %v90 = vld [vmem:[%s3 + $0x2c] sm:$0xf]
    %v91 = vld [vmem:[%s0] sm:$0xff]
    %v92 = vld [vmem:[%s0 + $0x8] sm:$0xff]
    %v93 = vlaneseq
    %v94 = vand.u32 %v93, 127
    %95 = vset.pattern.permute.xlu0 0
    %96 = vperm.xlu0 %95, %v91
    %v97 = vpop.permute.xlu0 %96
    %98 = vset.pattern.permute.xlu0 0
    %99 = vperm.xlu0 %98, %v92
    %v100 = vpop.permute.xlu0 %99
    %vm101 = vcmp.eq.s32.totalorder %v94, %v97
    %vm102 = vcmp.eq.s32.totalorder %v94, %v100
    %v103 = vsel %vm101, 1, 0
    %v104 = vsel %vm102, 1, 0
    %v105 = vcvt.s32.f32 %v103
    %v106 = vcvt.s32.f32 %v104
    %v107 = vpack.c.bf16 %v106, %v105
    %v124 = vunpack.c.l.b16 %v39
    %v125 = vunpack.c.l.b16 %v40
    %v126 = vunpack.c.l.b16 %v41
    %v127 = vunpack.c.l.b16 %v42
    %v128 = vunpack.c.l.b16 %v43
    %v129 = vunpack.c.l.b16 %v44
    %v130 = vunpack.c.l.b16 %v45
    %v131 = vunpack.c.l.b16 %v46
    %v132 = vunpack.c.l.b16 %v47
    %v133 = vunpack.c.l.b16 %v48
    %v134 = vunpack.c.l.b16 %v49
    %v135 = vunpack.c.l.b16 %v50
    %v136 = vunpack.c.l.b16 %v51
    %v137 = vunpack.c.l.b16 %v52
    %v138 = vunpack.c.l.b16 %v53
    %v139 = vunpack.c.l.b16 %v54
    %v140 = vpack.c.b16 %v125, %v124
    %v141 = vpack.c.b16 %v127, %v126
    %v142 = vpack.c.b16 %v129, %v128
    %v143 = vpack.c.b16 %v131, %v130
    %v144 = vpack.c.b16 %v133, %v132
    %v145 = vpack.c.b16 %v135, %v134
    %v146 = vpack.c.b16 %v137, %v136
    %v147 = vpack.c.b16 %v139, %v138
    %156 = vmatprep.subr.bf16.mxu0 0
    %157 = vmatpush1.bf16.msra.mxu0 %v140
    %158 = vmatprep.subr.bf16.mxu0 0
    %159 = vmatpush1.bf16.msra.mxu0 %v141
    %160 = vmatprep.subr.bf16.mxu0 0
    %161 = vmatpush1.bf16.msra.mxu0 %v142
    %162 = vmatprep.subr.bf16.mxu0 0
    %163 = vmatpush1.bf16.msra.mxu0 %v143
    %164 = vmatprep.subr.bf16.mxu0 0
    %165 = vmatpush1.bf16.msra.mxu0 %v144
    %166 = vmatprep.subr.bf16.mxu0 0
    %167 = vmatpush1.bf16.msra.mxu0 %v145
    %168 = vmatprep.subr.bf16.mxu0 0
    %169 = vmatpush1.bf16.msra.mxu0 %v146
    %170 = vmatprep.subr.bf16.mxu0 0
    %171 = vmatpush1.bf16.msra.mxu0 %v147
    %172 = vmatprep.subr.bf16.mxu0 0
    %173 = vmatpush1.bf16.msra.mxu0 0
    %174 = vmatprep.subr.bf16.mxu0 0
    %175 = vmatpush1.bf16.msra.mxu0 0
    %176 = vmatprep.subr.bf16.mxu0 0
    %177 = vmatpush1.bf16.msra.mxu0 0
    %178 = vmatprep.subr.bf16.mxu0 0
    %179 = vmatpush1.bf16.msra.mxu0 0
    %180 = vmatprep.subr.bf16.mxu0 0
    %181 = vmatpush1.bf16.msra.mxu0 0
    %182 = vmatprep.subr.bf16.mxu0 0
    %183 = vmatpush1.bf16.msra.mxu0 0
    %184 = vmatprep.subr.bf16.mxu0 0
    %185 = vmatpush1.bf16.msra.mxu0 0
    %186 = vmatprep.subr.bf16.mxu0 0
    %187 = vmatpush1.bf16.msra.mxu0 0
    %188 = vmatprep.mubr.bf16.mxu0 0
    %189 = vmatmul.mubr.bf16.gmra.mrb[0].mxu0 %v107
    %v190 = vpop.f32.mrb[0].mxu0
    %v191 = vadd.f32 %v26, %v190
    %v192 = vpop.f32.mrb[0].mxu0
    %v193 = vpop.f32.mrb[0].mxu0
    %v194 = vadd.f32 %v26, %v193
    %v195 = vpop.f32.mrb[0].mxu0
    %196 = vdwg.mxu0
    %vm197 = vcmask 261120
    %v198 = vsel %vm197, %v191, 0.0
    %199 = vadd.xlane.f32.xlu0 %v198
    %v200 = vpop.xlane.xlu0 %199
    %v201 = vsel %vm197, %v194, 0.0
    %202 = vadd.xlane.f32.xlu0 %v201
    %v203 = vpop.xlane.xlu0 %202
    %v204 = vrcp.pop 32.0
    %v205 = vmul.f32 %v200, %v204
    %v206 = vmul.f32 %v203, %v204
    %v207 = vsub.f32 %v191, %v205
    %v208 = vsub.f32 %v194, %v206
    %v209 = vmul.f32 %v207, %v207
    %v210 = vmul.f32 %v208, %v208
    %v211 = vsel %vm197, %v209, 0.0
    %212 = vadd.xlane.f32.xlu0 %v211
    %v213 = vpop.xlane.xlu0 %212
    %v214 = vsel %vm197, %v210, 0.0
    %215 = vadd.xlane.f32.xlu0 %v214
    %v216 = vpop.xlane.xlu0 %215
    %v217 = vmul.f32 %v213, %v204
    %v218 = vmul.f32 %v216, %v204
    %v219 = vadd.f32 %v217, 1e-12
    %v220 = vadd.f32 %v218, 1e-12
    %v221 = vrsqrt.pop %v219
    %v222 = vrsqrt.pop %v220
    %v223 = vmul.f32 %v207, %v221
    %v224 = vmul.f32 %v208, %v222
    %v225 = vlaneseq
    %v226 = vshrl.u32 %v225, 7
    %v227 = vsub.s32 0, %v226
    %v228 = vrot.slane %v27, %v227
    %v229 = vmul.f32 %v223, %v228
    %v230 = vmul.f32 %v224, %v228
    %v231 = vlaneseq
    %v232 = vshrl.u32 %v231, 7
    %v233 = vsub.s32 0, %v232
    %v234 = vrot.slane %v28, %v233
    %v235 = vadd.f32 %v229, %v234
    %v236 = vadd.f32 %v230, %v234
    %v237 = vpack.c.bf16 %v236, %v235
    %v238 = vlaneseq
    %v239 = vshrl.u32 %v238, 7
    %v240 = vsub.s32 0, %v239
    %v241 = vrot.slane %v29, %v240
    %v246 = vunpack.c.l.b16 %v79
    %v247 = vunpack.c.l.b16 %v80
    %v248 = vunpack.c.l.b16 %v81
    %v249 = vunpack.c.l.b16 %v82
    %v250 = vpack.c.b16 %v247, %v246
    %v251 = vpack.c.b16 %v249, %v248
    %v255 = vsel %vm197, %v237, 0
    %257 = vmatprep.subr.bf16.mxu0 0
    %258 = vmatpush1.bf16.msra.mxu0 %v250
    %259 = vmatprep.subr.bf16.mxu0 0
    %260 = vmatpush1.bf16.msra.mxu0 %v251
    %261 = vmatprep.subr.bf16.mxu0 0
    %262 = vmatpush1.bf16.msra.mxu0 0
    %263 = vmatprep.subr.bf16.mxu0 0
    %264 = vmatpush1.bf16.msra.mxu0 0
    %265 = vmatprep.subr.bf16.mxu0 0
    %266 = vmatpush1.bf16.msra.mxu0 0
    %267 = vmatprep.subr.bf16.mxu0 0
    %268 = vmatpush1.bf16.msra.mxu0 0
    %269 = vmatprep.subr.bf16.mxu0 0
    %270 = vmatpush1.bf16.msra.mxu0 0
    %271 = vmatprep.subr.bf16.mxu0 0
    %272 = vmatpush1.bf16.msra.mxu0 0
    %273 = vmatprep.subr.bf16.mxu0 0
    %274 = vmatpush1.bf16.msra.mxu0 0
    %275 = vmatprep.subr.bf16.mxu0 0
    %276 = vmatpush1.bf16.msra.mxu0 0
    %277 = vmatprep.subr.bf16.mxu0 0
    %278 = vmatpush1.bf16.msra.mxu0 0
    %279 = vmatprep.subr.bf16.mxu0 0
    %280 = vmatpush1.bf16.msra.mxu0 0
    %281 = vmatprep.subr.bf16.mxu0 0
    %282 = vmatpush1.bf16.msra.mxu0 0
    %283 = vmatprep.subr.bf16.mxu0 0
    %284 = vmatpush1.bf16.msra.mxu0 0
    %285 = vmatprep.subr.bf16.mxu0 0
    %286 = vmatpush1.bf16.msra.mxu0 0
    %287 = vmatprep.subr.bf16.mxu0 0
    %288 = vmatpush1.bf16.msra.mxu0 0
    %289 = vmatprep.mubr.bf16.mxu0 0
    %290 = vmatmul.mubr.bf16.gmra.mrb[0].mxu0 %v255
    %v291 = vpop.f32.mrb[0].mxu0
    %v292 = vadd.f32 %v241, %v291
    %v293 = vpop.f32.mrb[0].mxu0
    %v294 = vpop.f32.mrb[0].mxu0
    %v295 = vadd.f32 %v241, %v294
    %v296 = vpop.f32.mrb[0].mxu0
    %297 = vdwg.mxu0
    %v298 = vpack.c.bf16 %v295, %v292
    %v299 = vld [vmem:[%s1] sm:$0x1]
    %v300 = vsub.f32 1.0, %v299
    %v301 = vmul.f32 %v300, -1e+09
    %v302 = vlaneseq
    %v303 = vshrl.u32 %v302, 7
    %v304 = vadd.s32 %v303, 8
    %v305 = vxor.u32 %v303, %v94
    %v306 = vxor.u32 %v304, %v94
    %vm307 = vcmp.lt.s32.totalorder %v305, 8
    %vm308 = vcmp.lt.s32.totalorder %v306, 8
    %v309 = vsel %vm307, 0.0, -1e+09
    %v310 = vsel %vm308, 0.0, -1e+09
    %v312 = vlaneseq
    %v313 = vshrl.u32 %v312, 7
    %v314 = vsub.s32 0, %v313
    %v315 = vrot.slane %v301, %v314
    %v317 = vadd.f32 %v309, %v315
    %v318 = vadd.f32 %v310, %v315
    %320 = vrot.lane.b32.xlu0 %v298, 96
    %v321 = vpop.permute.xlu0 %320
    %vm322 = vcmask 64512
    %v324 = vsel %vm322, %v298, 0
    %v327 = vsel %vm322, %v321, 0
    %329 = vmatprep.subr.bf16.mxu0 0
    %330 = vmatpush1.bf16.xpose.msra.mxu0 %v327
    %331 = vmatprep.subr.bf16.mxu0 0
    %332 = vmatpush1.bf16.xpose.msra.mxu0 0
    %333 = vmatprep.subr.bf16.mxu0 0
    %334 = vmatpush1.bf16.xpose.msra.mxu0 0
    %335 = vmatprep.subr.bf16.mxu0 0
    %336 = vmatpush1.bf16.xpose.msra.mxu0 0
    %337 = vmatprep.subr.bf16.mxu0 0
    %338 = vmatpush1.bf16.xpose.msra.mxu0 0
    %339 = vmatprep.subr.bf16.mxu0 0
    %340 = vmatpush1.bf16.xpose.msra.mxu0 0
    %341 = vmatprep.subr.bf16.mxu0 0
    %342 = vmatpush1.bf16.xpose.msra.mxu0 0
    %343 = vmatprep.subr.bf16.mxu0 0
    %344 = vmatpush1.bf16.xpose.msra.mxu0 0
    %345 = vmatprep.subr.bf16.mxu0 0
    %346 = vmatpush1.bf16.xpose.msra.mxu0 0
    %347 = vmatprep.subr.bf16.mxu0 0
    %348 = vmatpush1.bf16.xpose.msra.mxu0 0
    %349 = vmatprep.subr.bf16.mxu0 0
    %350 = vmatpush1.bf16.xpose.msra.mxu0 0
    %351 = vmatprep.subr.bf16.mxu0 0
    %352 = vmatpush1.bf16.xpose.msra.mxu0 0
    %353 = vmatprep.subr.bf16.mxu0 0
    %354 = vmatpush1.bf16.xpose.msra.mxu0 0
    %355 = vmatprep.subr.bf16.mxu0 0
    %356 = vmatpush1.bf16.xpose.msra.mxu0 0
    %357 = vmatprep.subr.bf16.mxu0 0
    %358 = vmatpush1.bf16.xpose.msra.mxu0 0
    %359 = vmatprep.subr.bf16.mxu0 0
    %360 = vmatpush1.bf16.xpose.msra.mxu0 0
    %361 = vmatprep.mubr.bf16.mxu0 0
    %362 = vmatmul.mubr.bf16.gmra.mrb[0].mxu0 %v324
    %v363 = vpop.f32.mrb[0].mxu0
    %v364 = vadd.f32 0.0, %v363
    %v365 = vpop.f32.mrb[0].mxu0
    %v366 = vpop.f32.mrb[0].mxu0
    %v367 = vadd.f32 0.0, %v366
    %v368 = vpop.f32.mrb[0].mxu0
    %369 = vdwg.mxu0
    %v370 = vmul.f32 %v364, 0.35355338
    %v371 = vmul.f32 %v367, 0.35355338
    %v372 = vadd.f32 %v370, %v317
    %v373 = vadd.f32 %v371, %v318
    %vm374 = vcmask 130048
    %v375 = vsel %vm374, %v372, -inf
    %376 = vmax.xlane.f32.xlu0 %v375
    %v377 = vpop.xlane.xlu0 %376
    %v378 = vsel %vm374, %v373, -inf
    %379 = vmax.xlane.f32.xlu0 %v378
    %v380 = vpop.xlane.xlu0 %379
    %v381 = vsub.f32 %v372, %v377
    %v382 = vsub.f32 %v373, %v380
    %v383 = vmul.f32 %v381, 1.442695
    %v384 = vpow.pop %v383
    %v385 = vmul.f32 %v382, 1.442695
    %v386 = vpow.pop %v385
    %v387 = vsel %vm374, %v384, 0.0
    %388 = vadd.xlane.f32.xlu0 %v387
    %v389 = vpop.xlane.xlu0 %388
    %v390 = vsel %vm374, %v386, 0.0
    %391 = vadd.xlane.f32.xlu0 %v390
    %v392 = vpop.xlane.xlu0 %391
    %v393 = vrcp.pop %v389
    %v394 = vrcp.pop %v392
    %v395 = vmul.f32 %v384, %v393
    %v396 = vmul.f32 %v386, %v394
    %v397 = vpack.c.bf16 %v396, %v395
    %398 = vrot.lane.b32.xlu0 %v298, 64
    %v399 = vpop.permute.xlu0 %398
    %v402 = vsel %vm374, %v397, 0
    %404 = vmatprep.subr.bf16.mxu0 0
    %405 = vmatpush1.bf16.msra.mxu0 %v399
    %406 = vmatprep.subr.bf16.mxu0 0
    %407 = vmatpush1.bf16.msra.mxu0 0
    %408 = vmatprep.subr.bf16.mxu0 0
    %409 = vmatpush1.bf16.msra.mxu0 0
    %410 = vmatprep.subr.bf16.mxu0 0
    %411 = vmatpush1.bf16.msra.mxu0 0
    %412 = vmatprep.subr.bf16.mxu0 0
    %413 = vmatpush1.bf16.msra.mxu0 0
    %414 = vmatprep.subr.bf16.mxu0 0
    %415 = vmatpush1.bf16.msra.mxu0 0
    %416 = vmatprep.subr.bf16.mxu0 0
    %417 = vmatpush1.bf16.msra.mxu0 0
    %418 = vmatprep.subr.bf16.mxu0 0
    %419 = vmatpush1.bf16.msra.mxu0 0
    %420 = vmatprep.subr.bf16.mxu0 0
    %421 = vmatpush1.bf16.msra.mxu0 0
    %422 = vmatprep.subr.bf16.mxu0 0
    %423 = vmatpush1.bf16.msra.mxu0 0
    %424 = vmatprep.subr.bf16.mxu0 0
    %425 = vmatpush1.bf16.msra.mxu0 0
    %426 = vmatprep.subr.bf16.mxu0 0
    %427 = vmatpush1.bf16.msra.mxu0 0
    %428 = vmatprep.subr.bf16.mxu0 0
    %429 = vmatpush1.bf16.msra.mxu0 0
    %430 = vmatprep.subr.bf16.mxu0 0
    %431 = vmatpush1.bf16.msra.mxu0 0
    %432 = vmatprep.subr.bf16.mxu0 0
    %433 = vmatpush1.bf16.msra.mxu0 0
    %434 = vmatprep.subr.bf16.mxu0 0
    %435 = vmatpush1.bf16.msra.mxu0 0
    %436 = vmatprep.mubr.bf16.mxu0 0
    %437 = vmatmul.mubr.bf16.gmra.mrb[0].mxu0 %v402
    %v438 = vpop.f32.mrb[0].mxu0
    %v439 = vadd.f32 0.0, %v438
    %v440 = vpop.f32.mrb[0].mxu0
    %v441 = vpop.f32.mrb[0].mxu0
    %v442 = vadd.f32 0.0, %v441
    %v443 = vpop.f32.mrb[0].mxu0
    %444 = vdwg.mxu0
    %445 = vrot.lane.b32.xlu0 %v298, 120
    %v446 = vpop.permute.xlu0 %445
    %447 = vrot.lane.b32.xlu0 %v298, 88
    %v448 = vpop.permute.xlu0 %447
    %v450 = vsel %vm322, %v446, 0
    %v453 = vsel %vm322, %v448, 0
    %455 = vmatprep.subr.bf16.mxu0 0
    %456 = vmatpush1.bf16.xpose.msra.mxu0 %v453
    %457 = vmatprep.subr.bf16.mxu0 0
    %458 = vmatpush1.bf16.xpose.msra.mxu0 0
    %459 = vmatprep.subr.bf16.mxu0 0
    %460 = vmatpush1.bf16.xpose.msra.mxu0 0
    %461 = vmatprep.subr.bf16.mxu0 0
    %462 = vmatpush1.bf16.xpose.msra.mxu0 0
    %463 = vmatprep.subr.bf16.mxu0 0
    %464 = vmatpush1.bf16.xpose.msra.mxu0 0
    %465 = vmatprep.subr.bf16.mxu0 0
    %466 = vmatpush1.bf16.xpose.msra.mxu0 0
    %467 = vmatprep.subr.bf16.mxu0 0
    %468 = vmatpush1.bf16.xpose.msra.mxu0 0
    %469 = vmatprep.subr.bf16.mxu0 0
    %470 = vmatpush1.bf16.xpose.msra.mxu0 0
    %471 = vmatprep.subr.bf16.mxu0 0
    %472 = vmatpush1.bf16.xpose.msra.mxu0 0
    %473 = vmatprep.subr.bf16.mxu0 0
    %474 = vmatpush1.bf16.xpose.msra.mxu0 0
    %475 = vmatprep.subr.bf16.mxu0 0
    %476 = vmatpush1.bf16.xpose.msra.mxu0 0
    %477 = vmatprep.subr.bf16.mxu0 0
    %478 = vmatpush1.bf16.xpose.msra.mxu0 0
    %479 = vmatprep.subr.bf16.mxu0 0
    %480 = vmatpush1.bf16.xpose.msra.mxu0 0
    %481 = vmatprep.subr.bf16.mxu0 0
    %482 = vmatpush1.bf16.xpose.msra.mxu0 0
    %483 = vmatprep.subr.bf16.mxu0 0
    %484 = vmatpush1.bf16.xpose.msra.mxu0 0
    %485 = vmatprep.subr.bf16.mxu0 0
    %486 = vmatpush1.bf16.xpose.msra.mxu0 0
    %487 = vmatprep.mubr.bf16.mxu0 0
    %488 = vmatmul.mubr.bf16.gmra.mrb[0].mxu0 %v450
    %v489 = vpop.f32.mrb[0].mxu0
    %v490 = vadd.f32 0.0, %v489
    %v491 = vpop.f32.mrb[0].mxu0
    %v492 = vpop.f32.mrb[0].mxu0
    %v493 = vadd.f32 0.0, %v492
    %v494 = vpop.f32.mrb[0].mxu0
    %495 = vdwg.mxu0
    %v496 = vmul.f32 %v490, 0.35355338
    %v497 = vmul.f32 %v493, 0.35355338
    %v498 = vadd.f32 %v496, %v317
    %v499 = vadd.f32 %v497, %v318
    %v500 = vsel %vm374, %v498, -inf
    %501 = vmax.xlane.f32.xlu0 %v500
    %v502 = vpop.xlane.xlu0 %501
    %v503 = vsel %vm374, %v499, -inf
    %504 = vmax.xlane.f32.xlu0 %v503
    %v505 = vpop.xlane.xlu0 %504
    %v506 = vsub.f32 %v498, %v502
    %v507 = vsub.f32 %v499, %v505
    %v508 = vmul.f32 %v506, 1.442695
    %v509 = vpow.pop %v508
    %v510 = vmul.f32 %v507, 1.442695
    %v511 = vpow.pop %v510
    %v512 = vsel %vm374, %v509, 0.0
    %513 = vadd.xlane.f32.xlu0 %v512
    %v514 = vpop.xlane.xlu0 %513
    %v515 = vsel %vm374, %v511, 0.0
    %516 = vadd.xlane.f32.xlu0 %v515
    %v517 = vpop.xlane.xlu0 %516
    %v518 = vrcp.pop %v514
    %v519 = vrcp.pop %v517
    %v520 = vmul.f32 %v509, %v518
    %v521 = vmul.f32 %v511, %v519
    %v522 = vpack.c.bf16 %v521, %v520
    %523 = vrot.lane.b32.xlu0 %v298, 56
    %v524 = vpop.permute.xlu0 %523
    %v527 = vsel %vm374, %v522, 0
    %529 = vmatprep.subr.bf16.mxu0 0
    %530 = vmatpush1.bf16.msra.mxu0 %v524
    %531 = vmatprep.subr.bf16.mxu0 0
    %532 = vmatpush1.bf16.msra.mxu0 0
    %533 = vmatprep.subr.bf16.mxu0 0
    %534 = vmatpush1.bf16.msra.mxu0 0
    %535 = vmatprep.subr.bf16.mxu0 0
    %536 = vmatpush1.bf16.msra.mxu0 0
    %537 = vmatprep.subr.bf16.mxu0 0
    %538 = vmatpush1.bf16.msra.mxu0 0
    %539 = vmatprep.subr.bf16.mxu0 0
    %540 = vmatpush1.bf16.msra.mxu0 0
    %541 = vmatprep.subr.bf16.mxu0 0
    %542 = vmatpush1.bf16.msra.mxu0 0
    %543 = vmatprep.subr.bf16.mxu0 0
    %544 = vmatpush1.bf16.msra.mxu0 0
    %545 = vmatprep.subr.bf16.mxu0 0
    %546 = vmatpush1.bf16.msra.mxu0 0
    %547 = vmatprep.subr.bf16.mxu0 0
    %548 = vmatpush1.bf16.msra.mxu0 0
    %549 = vmatprep.subr.bf16.mxu0 0
    %550 = vmatpush1.bf16.msra.mxu0 0
    %551 = vmatprep.subr.bf16.mxu0 0
    %552 = vmatpush1.bf16.msra.mxu0 0
    %553 = vmatprep.subr.bf16.mxu0 0
    %554 = vmatpush1.bf16.msra.mxu0 0
    %555 = vmatprep.subr.bf16.mxu0 0
    %556 = vmatpush1.bf16.msra.mxu0 0
    %557 = vmatprep.subr.bf16.mxu0 0
    %558 = vmatpush1.bf16.msra.mxu0 0
    %559 = vmatprep.subr.bf16.mxu0 0
    %560 = vmatpush1.bf16.msra.mxu0 0
    %561 = vmatprep.mubr.bf16.mxu0 0
    %562 = vmatmul.mubr.bf16.gmra.mrb[0].mxu0 %v527
    %v563 = vpop.f32.mrb[0].mxu0
    %v564 = vadd.f32 0.0, %v563
    %v565 = vpop.f32.mrb[0].mxu0
    %v566 = vpop.f32.mrb[0].mxu0
    %v567 = vadd.f32 0.0, %v566
    %v568 = vpop.f32.mrb[0].mxu0
    %569 = vdwg.mxu0
    %570 = vrot.lane.b32.xlu0 %v298, 112
    %v571 = vpop.permute.xlu0 %570
    %572 = vrot.lane.b32.xlu0 %v298, 80
    %v573 = vpop.permute.xlu0 %572
    %v575 = vsel %vm322, %v571, 0
    %v578 = vsel %vm322, %v573, 0
    %580 = vmatprep.subr.bf16.mxu0 0
    %581 = vmatpush1.bf16.xpose.msra.mxu0 %v578
    %582 = vmatprep.subr.bf16.mxu0 0
    %583 = vmatpush1.bf16.xpose.msra.mxu0 0
    %584 = vmatprep.subr.bf16.mxu0 0
    %585 = vmatpush1.bf16.xpose.msra.mxu0 0
    %586 = vmatprep.subr.bf16.mxu0 0
    %587 = vmatpush1.bf16.xpose.msra.mxu0 0
    %588 = vmatprep.subr.bf16.mxu0 0
    %589 = vmatpush1.bf16.xpose.msra.mxu0 0
    %590 = vmatprep.subr.bf16.mxu0 0
    %591 = vmatpush1.bf16.xpose.msra.mxu0 0
    %592 = vmatprep.subr.bf16.mxu0 0
    %593 = vmatpush1.bf16.xpose.msra.mxu0 0
    %594 = vmatprep.subr.bf16.mxu0 0
    %595 = vmatpush1.bf16.xpose.msra.mxu0 0
    %596 = vmatprep.subr.bf16.mxu0 0
    %597 = vmatpush1.bf16.xpose.msra.mxu0 0
    %598 = vmatprep.subr.bf16.mxu0 0
    %599 = vmatpush1.bf16.xpose.msra.mxu0 0
    %600 = vmatprep.subr.bf16.mxu0 0
    %601 = vmatpush1.bf16.xpose.msra.mxu0 0
    %602 = vmatprep.subr.bf16.mxu0 0
    %603 = vmatpush1.bf16.xpose.msra.mxu0 0
    %604 = vmatprep.subr.bf16.mxu0 0
    %605 = vmatpush1.bf16.xpose.msra.mxu0 0
    %606 = vmatprep.subr.bf16.mxu0 0
    %607 = vmatpush1.bf16.xpose.msra.mxu0 0
    %608 = vmatprep.subr.bf16.mxu0 0
    %609 = vmatpush1.bf16.xpose.msra.mxu0 0
    %610 = vmatprep.subr.bf16.mxu0 0
    %611 = vmatpush1.bf16.xpose.msra.mxu0 0
    %612 = vmatprep.mubr.bf16.mxu0 0
    %613 = vmatmul.mubr.bf16.gmra.mrb[0].mxu0 %v575
    %v614 = vpop.f32.mrb[0].mxu0
    %v615 = vadd.f32 0.0, %v614
    %v616 = vpop.f32.mrb[0].mxu0
    %v617 = vpop.f32.mrb[0].mxu0
    %v618 = vadd.f32 0.0, %v617
    %v619 = vpop.f32.mrb[0].mxu0
    %620 = vdwg.mxu0
    %v621 = vmul.f32 %v615, 0.35355338
    %v622 = vmul.f32 %v618, 0.35355338
    %v623 = vadd.f32 %v621, %v317
    %v624 = vadd.f32 %v622, %v318
    %v625 = vsel %vm374, %v623, -inf
    %626 = vmax.xlane.f32.xlu0 %v625
    %v627 = vpop.xlane.xlu0 %626
    %v628 = vsel %vm374, %v624, -inf
    %629 = vmax.xlane.f32.xlu0 %v628
    %v630 = vpop.xlane.xlu0 %629
    %v631 = vsub.f32 %v623, %v627
    %v632 = vsub.f32 %v624, %v630
    %v633 = vmul.f32 %v631, 1.442695
    %v634 = vpow.pop %v633
    %v635 = vmul.f32 %v632, 1.442695
    %v636 = vpow.pop %v635
    %v637 = vsel %vm374, %v634, 0.0
    %638 = vadd.xlane.f32.xlu0 %v637
    %v639 = vpop.xlane.xlu0 %638
    %v640 = vsel %vm374, %v636, 0.0
    %641 = vadd.xlane.f32.xlu0 %v640
    %v642 = vpop.xlane.xlu0 %641
    %v643 = vrcp.pop %v639
    %v644 = vrcp.pop %v642
    %v645 = vmul.f32 %v634, %v643
    %v646 = vmul.f32 %v636, %v644
    %v647 = vpack.c.bf16 %v646, %v645
    %648 = vrot.lane.b32.xlu0 %v298, 48
    %v649 = vpop.permute.xlu0 %648
    %v652 = vsel %vm374, %v647, 0
    %654 = vmatprep.subr.bf16.mxu0 0
    %655 = vmatpush1.bf16.msra.mxu0 %v649
    %656 = vmatprep.subr.bf16.mxu0 0
    %657 = vmatpush1.bf16.msra.mxu0 0
    %658 = vmatprep.subr.bf16.mxu0 0
    %659 = vmatpush1.bf16.msra.mxu0 0
    %660 = vmatprep.subr.bf16.mxu0 0
    %661 = vmatpush1.bf16.msra.mxu0 0
    %662 = vmatprep.subr.bf16.mxu0 0
    %663 = vmatpush1.bf16.msra.mxu0 0
    %664 = vmatprep.subr.bf16.mxu0 0
    %665 = vmatpush1.bf16.msra.mxu0 0
    %666 = vmatprep.subr.bf16.mxu0 0
    %667 = vmatpush1.bf16.msra.mxu0 0
    %668 = vmatprep.subr.bf16.mxu0 0
    %669 = vmatpush1.bf16.msra.mxu0 0
    %670 = vmatprep.subr.bf16.mxu0 0
    %671 = vmatpush1.bf16.msra.mxu0 0
    %672 = vmatprep.subr.bf16.mxu0 0
    %673 = vmatpush1.bf16.msra.mxu0 0
    %674 = vmatprep.subr.bf16.mxu0 0
    %675 = vmatpush1.bf16.msra.mxu0 0
    %676 = vmatprep.subr.bf16.mxu0 0
    %677 = vmatpush1.bf16.msra.mxu0 0
    %678 = vmatprep.subr.bf16.mxu0 0
    %679 = vmatpush1.bf16.msra.mxu0 0
    %680 = vmatprep.subr.bf16.mxu0 0
    %681 = vmatpush1.bf16.msra.mxu0 0
    %682 = vmatprep.subr.bf16.mxu0 0
    %683 = vmatpush1.bf16.msra.mxu0 0
    %684 = vmatprep.subr.bf16.mxu0 0
    %685 = vmatpush1.bf16.msra.mxu0 0
    %686 = vmatprep.mubr.bf16.mxu0 0
    %687 = vmatmul.mubr.bf16.gmra.mrb[0].mxu0 %v652
    %v688 = vpop.f32.mrb[0].mxu0
    %v689 = vadd.f32 0.0, %v688
    %v690 = vpop.f32.mrb[0].mxu0
    %v691 = vpop.f32.mrb[0].mxu0
    %v692 = vadd.f32 0.0, %v691
    %v693 = vpop.f32.mrb[0].mxu0
    %694 = vdwg.mxu0
    %695 = vrot.lane.b32.xlu0 %v298, 104
    %v696 = vpop.permute.xlu0 %695
    %697 = vrot.lane.b32.xlu0 %v298, 72
    %v698 = vpop.permute.xlu0 %697
    %v700 = vsel %vm322, %v696, 0
    %v703 = vsel %vm322, %v698, 0
    %705 = vmatprep.subr.bf16.mxu0 0
    %706 = vmatpush1.bf16.xpose.msra.mxu0 %v703
    %707 = vmatprep.subr.bf16.mxu0 0
    %708 = vmatpush1.bf16.xpose.msra.mxu0 0
    %709 = vmatprep.subr.bf16.mxu0 0
    %710 = vmatpush1.bf16.xpose.msra.mxu0 0
    %711 = vmatprep.subr.bf16.mxu0 0
    %712 = vmatpush1.bf16.xpose.msra.mxu0 0
    %713 = vmatprep.subr.bf16.mxu0 0
    %714 = vmatpush1.bf16.xpose.msra.mxu0 0
    %715 = vmatprep.subr.bf16.mxu0 0
    %716 = vmatpush1.bf16.xpose.msra.mxu0 0
    %717 = vmatprep.subr.bf16.mxu0 0
    %718 = vmatpush1.bf16.xpose.msra.mxu0 0
    %719 = vmatprep.subr.bf16.mxu0 0
    %720 = vmatpush1.bf16.xpose.msra.mxu0 0
    %721 = vmatprep.subr.bf16.mxu0 0
    %722 = vmatpush1.bf16.xpose.msra.mxu0 0
    %723 = vmatprep.subr.bf16.mxu0 0
    %724 = vmatpush1.bf16.xpose.msra.mxu0 0
    %725 = vmatprep.subr.bf16.mxu0 0
    %726 = vmatpush1.bf16.xpose.msra.mxu0 0
    %727 = vmatprep.subr.bf16.mxu0 0
    %728 = vmatpush1.bf16.xpose.msra.mxu0 0
    %729 = vmatprep.subr.bf16.mxu0 0
    %730 = vmatpush1.bf16.xpose.msra.mxu0 0
    %731 = vmatprep.subr.bf16.mxu0 0
    %732 = vmatpush1.bf16.xpose.msra.mxu0 0
    %733 = vmatprep.subr.bf16.mxu0 0
    %734 = vmatpush1.bf16.xpose.msra.mxu0 0
    %735 = vmatprep.subr.bf16.mxu0 0
    %736 = vmatpush1.bf16.xpose.msra.mxu0 0
    %737 = vmatprep.mubr.bf16.mxu0 0
    %738 = vmatmul.mubr.bf16.gmra.mrb[0].mxu0 %v700
    %v739 = vpop.f32.mrb[0].mxu0
    %v740 = vadd.f32 0.0, %v739
    %v741 = vpop.f32.mrb[0].mxu0
    %v742 = vpop.f32.mrb[0].mxu0
    %v743 = vadd.f32 0.0, %v742
    %v744 = vpop.f32.mrb[0].mxu0
    %745 = vdwg.mxu0
    %v746 = vmul.f32 %v740, 0.35355338
    %v747 = vmul.f32 %v743, 0.35355338
    %v748 = vadd.f32 %v746, %v317
    %v749 = vadd.f32 %v747, %v318
    %v750 = vsel %vm374, %v748, -inf
    %751 = vmax.xlane.f32.xlu0 %v750
    %v752 = vpop.xlane.xlu0 %751
    %v753 = vsel %vm374, %v749, -inf
    %754 = vmax.xlane.f32.xlu0 %v753
    %v755 = vpop.xlane.xlu0 %754
    %v756 = vsub.f32 %v748, %v752
    %v757 = vsub.f32 %v749, %v755
    %v758 = vmul.f32 %v756, 1.442695
    %v759 = vpow.pop %v758
    %v760 = vmul.f32 %v757, 1.442695
    %v761 = vpow.pop %v760
    %v762 = vsel %vm374, %v759, 0.0
    %763 = vadd.xlane.f32.xlu0 %v762
    %v764 = vpop.xlane.xlu0 %763
    %v765 = vsel %vm374, %v761, 0.0
    %766 = vadd.xlane.f32.xlu0 %v765
    %v767 = vpop.xlane.xlu0 %766
    %v768 = vrcp.pop %v764
    %v769 = vrcp.pop %v767
    %v770 = vmul.f32 %v759, %v768
    %v771 = vmul.f32 %v761, %v769
    %v772 = vpack.c.bf16 %v771, %v770
    %773 = vrot.lane.b32.xlu0 %v298, 40
    %v774 = vpop.permute.xlu0 %773
    %v777 = vsel %vm374, %v772, 0
    %779 = vmatprep.subr.bf16.mxu0 0
    %780 = vmatpush1.bf16.msra.mxu0 %v774
    %781 = vmatprep.subr.bf16.mxu0 0
    %782 = vmatpush1.bf16.msra.mxu0 0
    %783 = vmatprep.subr.bf16.mxu0 0
    %784 = vmatpush1.bf16.msra.mxu0 0
    %785 = vmatprep.subr.bf16.mxu0 0
    %786 = vmatpush1.bf16.msra.mxu0 0
    %787 = vmatprep.subr.bf16.mxu0 0
    %788 = vmatpush1.bf16.msra.mxu0 0
    %789 = vmatprep.subr.bf16.mxu0 0
    %790 = vmatpush1.bf16.msra.mxu0 0
    %791 = vmatprep.subr.bf16.mxu0 0
    %792 = vmatpush1.bf16.msra.mxu0 0
    %793 = vmatprep.subr.bf16.mxu0 0
    %794 = vmatpush1.bf16.msra.mxu0 0
    %795 = vmatprep.subr.bf16.mxu0 0
    %796 = vmatpush1.bf16.msra.mxu0 0
    %797 = vmatprep.subr.bf16.mxu0 0
    %798 = vmatpush1.bf16.msra.mxu0 0
    %799 = vmatprep.subr.bf16.mxu0 0
    %800 = vmatpush1.bf16.msra.mxu0 0
    %801 = vmatprep.subr.bf16.mxu0 0
    %802 = vmatpush1.bf16.msra.mxu0 0
    %803 = vmatprep.subr.bf16.mxu0 0
    %804 = vmatpush1.bf16.msra.mxu0 0
    %805 = vmatprep.subr.bf16.mxu0 0
    %806 = vmatpush1.bf16.msra.mxu0 0
    %807 = vmatprep.subr.bf16.mxu0 0
    %808 = vmatpush1.bf16.msra.mxu0 0
    %809 = vmatprep.subr.bf16.mxu0 0
    %810 = vmatpush1.bf16.msra.mxu0 0
    %811 = vmatprep.mubr.bf16.mxu0 0
    %812 = vmatmul.mubr.bf16.gmra.mrb[0].mxu0 %v777
    %v813 = vpop.f32.mrb[0].mxu0
    %v814 = vadd.f32 0.0, %v813
    %v815 = vpop.f32.mrb[0].mxu0
    %v816 = vpop.f32.mrb[0].mxu0
    %v817 = vadd.f32 0.0, %v816
    %v818 = vpop.f32.mrb[0].mxu0
    %819 = vdwg.mxu0
    %822 = vrot.lane.b32.xlu0 %v564, 8
    %v823 = vpop.permute.xlu0 %822
    %824 = vrot.lane.b32.xlu0 %v567, 8
    %v825 = vpop.permute.xlu0 %824
    %830 = vrot.lane.b32.xlu0 %v689, 16
    %v831 = vpop.permute.xlu0 %830
    %832 = vrot.lane.b32.xlu0 %v692, 16
    %v833 = vpop.permute.xlu0 %832
    %838 = vrot.lane.b32.xlu0 %v814, 24
    %v839 = vpop.permute.xlu0 %838
    %840 = vrot.lane.b32.xlu0 %v817, 24
    %v841 = vpop.permute.xlu0 %840
    %v844 = vsel %vm322, %v439, %v823
    %v845 = vsel %vm322, %v442, %v825
    %v846 = vsel %vm374, %v844, %v831
    %v847 = vsel %vm374, %v845, %v833
    %vm848 = vcmask 195584
    %v849 = vsel %vm848, %v846, %v839
    %v850 = vsel %vm848, %v847, %v841
    %v851 = vpack.c.bf16 %v850, %v849
    %v852 = vlaneseq
    %v853 = vshrl.u32 %v852, 7
    %v854 = vsub.s32 0, %v853
    %v855 = vrot.slane %v30, %v854
    %v860 = vunpack.c.l.b16 %v55
    %v861 = vunpack.c.l.b16 %v56
    %v862 = vunpack.c.l.b16 %v57
    %v863 = vunpack.c.l.b16 %v58
    %v864 = vpack.c.b16 %v861, %v860
    %v865 = vpack.c.b16 %v863, %v862
    %v869 = vsel %vm197, %v851, 0
    %871 = vmatprep.subr.bf16.mxu0 0
    %872 = vmatpush1.bf16.msra.mxu0 %v864
    %873 = vmatprep.subr.bf16.mxu0 0
    %874 = vmatpush1.bf16.msra.mxu0 %v865
    %875 = vmatprep.subr.bf16.mxu0 0
    %876 = vmatpush1.bf16.msra.mxu0 0
    %877 = vmatprep.subr.bf16.mxu0 0
    %878 = vmatpush1.bf16.msra.mxu0 0
    %879 = vmatprep.subr.bf16.mxu0 0
    %880 = vmatpush1.bf16.msra.mxu0 0
    %881 = vmatprep.subr.bf16.mxu0 0
    %882 = vmatpush1.bf16.msra.mxu0 0
    %883 = vmatprep.subr.bf16.mxu0 0
    %884 = vmatpush1.bf16.msra.mxu0 0
    %885 = vmatprep.subr.bf16.mxu0 0
    %886 = vmatpush1.bf16.msra.mxu0 0
    %887 = vmatprep.subr.bf16.mxu0 0
    %888 = vmatpush1.bf16.msra.mxu0 0
    %889 = vmatprep.subr.bf16.mxu0 0
    %890 = vmatpush1.bf16.msra.mxu0 0
    %891 = vmatprep.subr.bf16.mxu0 0
    %892 = vmatpush1.bf16.msra.mxu0 0
    %893 = vmatprep.subr.bf16.mxu0 0
    %894 = vmatpush1.bf16.msra.mxu0 0
    %895 = vmatprep.subr.bf16.mxu0 0
    %896 = vmatpush1.bf16.msra.mxu0 0
    %897 = vmatprep.subr.bf16.mxu0 0
    %898 = vmatpush1.bf16.msra.mxu0 0
    %899 = vmatprep.subr.bf16.mxu0 0
    %900 = vmatpush1.bf16.msra.mxu0 0
    %901 = vmatprep.subr.bf16.mxu0 0
    %902 = vmatpush1.bf16.msra.mxu0 0
    %903 = vmatprep.mubr.bf16.mxu0 0
    %904 = vmatmul.mubr.bf16.gmra.mrb[0].mxu0 %v869
    %v905 = vpop.f32.mrb[0].mxu0
    %v906 = vadd.f32 %v855, %v905
    %v907 = vpop.f32.mrb[0].mxu0
    %v908 = vpop.f32.mrb[0].mxu0
    %v909 = vadd.f32 %v855, %v908
    %v910 = vpop.f32.mrb[0].mxu0
    %911 = vdwg.mxu0
    %v912 = vadd.f32 %v235, %v906
    %v913 = vadd.f32 %v236, %v909
    %v914 = vsel %vm197, %v912, 0.0
    %915 = vadd.xlane.f32.xlu0 %v914
    %v916 = vpop.xlane.xlu0 %915
    %v917 = vsel %vm197, %v913, 0.0
    %918 = vadd.xlane.f32.xlu0 %v917
    %v919 = vpop.xlane.xlu0 %918
    %v920 = vmul.f32 %v916, %v204
    %v921 = vmul.f32 %v919, %v204
    %v922 = vsub.f32 %v912, %v920
    %v923 = vsub.f32 %v913, %v921
    %v924 = vmul.f32 %v922, %v922
    %v925 = vmul.f32 %v923, %v923
    %v926 = vsel %vm197, %v924, 0.0
    %927 = vadd.xlane.f32.xlu0 %v926
    %v928 = vpop.xlane.xlu0 %927
    %v929 = vsel %vm197, %v925, 0.0
    %930 = vadd.xlane.f32.xlu0 %v929
    %v931 = vpop.xlane.xlu0 %930
    %v932 = vmul.f32 %v928, %v204
    %v933 = vmul.f32 %v931, %v204
    %v934 = vadd.f32 %v932, 1e-12
    %v935 = vadd.f32 %v933, 1e-12
    %v936 = vrsqrt.pop %v934
    %v937 = vrsqrt.pop %v935
    %v938 = vmul.f32 %v922, %v936
    %v939 = vmul.f32 %v923, %v937
    %v940 = vlaneseq
    %v941 = vshrl.u32 %v940, 7
    %v942 = vsub.s32 0, %v941
    %v943 = vrot.slane %v31, %v942
    %v944 = vmul.f32 %v938, %v943
    %v945 = vmul.f32 %v939, %v943
    %v946 = vlaneseq
    %v947 = vshrl.u32 %v946, 7
    %v948 = vsub.s32 0, %v947
    %v949 = vrot.slane %v32, %v948
    %v950 = vadd.f32 %v944, %v949
    %v951 = vadd.f32 %v945, %v949
    %v952 = vpack.c.bf16 %v951, %v950
    %v953 = vlaneseq
    %v954 = vshrl.u32 %v953, 7
    %v955 = vsub.s32 0, %v954
    %v956 = vrot.slane %v33, %v955
    %v961 = vunpack.c.l.b16 %v83
    %v962 = vunpack.c.l.b16 %v84
    %v963 = vunpack.c.l.b16 %v85
    %v964 = vunpack.c.l.b16 %v86
    %v965 = vpack.c.b16 %v962, %v961
    %v966 = vpack.c.b16 %v964, %v963
    %v970 = vsel %vm197, %v952, 0
    %972 = vmatprep.subr.bf16.mxu0 0
    %973 = vmatpush1.bf16.msra.mxu0 %v965
    %974 = vmatprep.subr.bf16.mxu0 0
    %975 = vmatpush1.bf16.msra.mxu0 %v966
    %976 = vmatprep.subr.bf16.mxu0 0
    %977 = vmatpush1.bf16.msra.mxu0 0
    %978 = vmatprep.subr.bf16.mxu0 0
    %979 = vmatpush1.bf16.msra.mxu0 0
    %980 = vmatprep.subr.bf16.mxu0 0
    %981 = vmatpush1.bf16.msra.mxu0 0
    %982 = vmatprep.subr.bf16.mxu0 0
    %983 = vmatpush1.bf16.msra.mxu0 0
    %984 = vmatprep.subr.bf16.mxu0 0
    %985 = vmatpush1.bf16.msra.mxu0 0
    %986 = vmatprep.subr.bf16.mxu0 0
    %987 = vmatpush1.bf16.msra.mxu0 0
    %988 = vmatprep.subr.bf16.mxu0 0
    %989 = vmatpush1.bf16.msra.mxu0 0
    %990 = vmatprep.subr.bf16.mxu0 0
    %991 = vmatpush1.bf16.msra.mxu0 0
    %992 = vmatprep.subr.bf16.mxu0 0
    %993 = vmatpush1.bf16.msra.mxu0 0
    %994 = vmatprep.subr.bf16.mxu0 0
    %995 = vmatpush1.bf16.msra.mxu0 0
    %996 = vmatprep.subr.bf16.mxu0 0
    %997 = vmatpush1.bf16.msra.mxu0 0
    %998 = vmatprep.subr.bf16.mxu0 0
    %999 = vmatpush1.bf16.msra.mxu0 0
    %1000 = vmatprep.subr.bf16.mxu0 0
    %1001 = vmatpush1.bf16.msra.mxu0 0
    %1002 = vmatprep.subr.bf16.mxu0 0
    %1003 = vmatpush1.bf16.msra.mxu0 0
    %1004 = vmatprep.mubr.bf16.mxu0 0
    %1005 = vmatmul.mubr.bf16.gmra.mrb[0].mxu0 %v970
    %v1006 = vpop.f32.mrb[0].mxu0
    %v1007 = vadd.f32 %v956, %v1006
    %v1008 = vpop.f32.mrb[0].mxu0
    %v1009 = vpop.f32.mrb[0].mxu0
    %v1010 = vadd.f32 %v956, %v1009
    %v1011 = vpop.f32.mrb[0].mxu0
    %1012 = vdwg.mxu0
    %v1013 = vmul.f32 %v1007, %v1007
    %v1014 = vmul.f32 %v1010, %v1010
    %v1015 = vmul.f32 %v1007, %v1013
    %v1016 = vmul.f32 %v1010, %v1014
    %v1017 = vmul.f32 %v1015, 0.044715
    %v1018 = vmul.f32 %v1016, 0.044715
    %v1019 = vadd.f32 %v1007, %v1017
    %v1020 = vadd.f32 %v1010, %v1018
    %v1021 = vmul.f32 %v1019, 0.7978846
    %v1022 = vmul.f32 %v1020, 0.7978846
    %v1023 = vtanh.pop %v1021
    %v1024 = vtanh.pop %v1022
    %v1025 = vadd.f32 %v1023, 1.0
    %v1026 = vadd.f32 %v1024, 1.0
    %v1027 = vmul.f32 %v1025, 0.5
    %v1028 = vmul.f32 %v1026, 0.5
    %v1029 = vmul.f32 %v1007, %v1027
    %v1030 = vmul.f32 %v1010, %v1028
    %v1031 = vpack.c.bf16 %v1030, %v1029
    %v1032 = vlaneseq
    %v1033 = vshrl.u32 %v1032, 7
    %v1034 = vsub.s32 0, %v1033
    %v1035 = vrot.slane %v34, %v1034
    %v1052 = vunpack.c.l.b16 %v59
    %v1053 = vunpack.c.l.b16 %v60
    %v1054 = vunpack.c.l.b16 %v61
    %v1055 = vunpack.c.l.b16 %v62
    %v1056 = vunpack.c.l.b16 %v63
    %v1057 = vunpack.c.l.b16 %v64
    %v1058 = vunpack.c.l.b16 %v65
    %v1059 = vunpack.c.l.b16 %v66
    %v1060 = vunpack.c.l.b16 %v67
    %v1061 = vunpack.c.l.b16 %v68
    %v1062 = vunpack.c.l.b16 %v69
    %v1063 = vunpack.c.l.b16 %v70
    %v1064 = vunpack.c.l.b16 %v71
    %v1065 = vunpack.c.l.b16 %v72
    %v1066 = vunpack.c.l.b16 %v73
    %v1067 = vunpack.c.l.b16 %v74
    %v1068 = vpack.c.b16 %v1053, %v1052
    %v1069 = vpack.c.b16 %v1055, %v1054
    %v1070 = vpack.c.b16 %v1057, %v1056
    %v1071 = vpack.c.b16 %v1059, %v1058
    %v1072 = vpack.c.b16 %v1061, %v1060
    %v1073 = vpack.c.b16 %v1063, %v1062
    %v1074 = vpack.c.b16 %v1065, %v1064
    %v1075 = vpack.c.b16 %v1067, %v1066
    %1084 = vmatprep.subr.bf16.mxu0 0
    %1085 = vmatpush1.bf16.msra.mxu0 %v1068
    %1086 = vmatprep.subr.bf16.mxu0 0
    %1087 = vmatpush1.bf16.msra.mxu0 %v1069
    %1088 = vmatprep.subr.bf16.mxu0 0
    %1089 = vmatpush1.bf16.msra.mxu0 %v1070
    %1090 = vmatprep.subr.bf16.mxu0 0
    %1091 = vmatpush1.bf16.msra.mxu0 %v1071
    %1092 = vmatprep.subr.bf16.mxu0 0
    %1093 = vmatpush1.bf16.msra.mxu0 %v1072
    %1094 = vmatprep.subr.bf16.mxu0 0
    %1095 = vmatpush1.bf16.msra.mxu0 %v1073
    %1096 = vmatprep.subr.bf16.mxu0 0
    %1097 = vmatpush1.bf16.msra.mxu0 %v1074
    %1098 = vmatprep.subr.bf16.mxu0 0
    %1099 = vmatpush1.bf16.msra.mxu0 %v1075
    %1100 = vmatprep.subr.bf16.mxu0 0
    %1101 = vmatpush1.bf16.msra.mxu0 0
    %1102 = vmatprep.subr.bf16.mxu0 0
    %1103 = vmatpush1.bf16.msra.mxu0 0
    %1104 = vmatprep.subr.bf16.mxu0 0
    %1105 = vmatpush1.bf16.msra.mxu0 0
    %1106 = vmatprep.subr.bf16.mxu0 0
    %1107 = vmatpush1.bf16.msra.mxu0 0
    %1108 = vmatprep.subr.bf16.mxu0 0
    %1109 = vmatpush1.bf16.msra.mxu0 0
    %1110 = vmatprep.subr.bf16.mxu0 0
    %1111 = vmatpush1.bf16.msra.mxu0 0
    %1112 = vmatprep.subr.bf16.mxu0 0
    %1113 = vmatpush1.bf16.msra.mxu0 0
    %1114 = vmatprep.subr.bf16.mxu0 0
    %1115 = vmatpush1.bf16.msra.mxu0 0
    %1116 = vmatprep.mubr.bf16.mxu0 0
    %1117 = vmatmul.mubr.bf16.gmra.mrb[0].mxu0 %v1031
    %v1118 = vpop.f32.mrb[0].mxu0
    %v1119 = vadd.f32 %v1035, %v1118
    %v1120 = vpop.f32.mrb[0].mxu0
    %v1121 = vpop.f32.mrb[0].mxu0
    %v1122 = vadd.f32 %v1035, %v1121
    %v1123 = vpop.f32.mrb[0].mxu0
    %1124 = vdwg.mxu0
    %v1125 = vadd.f32 %v950, %v1119
    %v1126 = vadd.f32 %v951, %v1122
    %v1127 = vsel %vm197, %v1125, 0.0
    %1128 = vadd.xlane.f32.xlu0 %v1127
    %v1129 = vpop.xlane.xlu0 %1128
    %v1130 = vsel %vm197, %v1126, 0.0
    %1131 = vadd.xlane.f32.xlu0 %v1130
    %v1132 = vpop.xlane.xlu0 %1131
    %v1133 = vmul.f32 %v1129, %v204
    %v1134 = vmul.f32 %v1132, %v204
    %v1135 = vsub.f32 %v1125, %v1133
    %v1136 = vsub.f32 %v1126, %v1134
    %v1137 = vmul.f32 %v1135, %v1135
    %v1138 = vmul.f32 %v1136, %v1136
    %v1139 = vsel %vm197, %v1137, 0.0
    %1140 = vadd.xlane.f32.xlu0 %v1139
    %v1141 = vpop.xlane.xlu0 %1140
    %v1142 = vsel %vm197, %v1138, 0.0
    %1143 = vadd.xlane.f32.xlu0 %v1142
    %v1144 = vpop.xlane.xlu0 %1143
    %v1145 = vmul.f32 %v1141, %v204
    %v1146 = vmul.f32 %v1144, %v204
    %v1147 = vadd.f32 %v1145, 1e-12
    %v1148 = vadd.f32 %v1146, 1e-12
    %v1149 = vrsqrt.pop %v1147
    %v1150 = vrsqrt.pop %v1148
    %v1151 = vmul.f32 %v1135, %v1149
    %v1152 = vmul.f32 %v1136, %v1150
    %v1153 = vlaneseq
    %v1154 = vshrl.u32 %v1153, 7
    %v1155 = vsub.s32 0, %v1154
    %v1156 = vrot.slane %v35, %v1155
    %v1157 = vmul.f32 %v1151, %v1156
    %v1158 = vmul.f32 %v1152, %v1156
    %v1159 = vlaneseq
    %v1160 = vshrl.u32 %v1159, 7
    %v1161 = vsub.s32 0, %v1160
    %v1162 = vrot.slane %v36, %v1161
    %v1163 = vadd.f32 %v1157, %v1162
    %v1164 = vadd.f32 %v1158, %v1162
    %1165 = vst.msk [vmem:[#allocation2] sm:$0xff] %vm197, %v1163
    %1166 = vst.msk [vmem:[#allocation2 + $0x8] sm:$0xff] %vm197, %v1164
    %v1168 = vrot.slane %v1164, 7
    %vm1170 = vcmask 1040384
    %v1171 = vsel %vm1170, %v1163, %v1168
    %v1172 = vpack.c.bf16 %v1171, %v1171
    %v1173 = vlaneseq
    %v1174 = vshrl.u32 %v1173, 7
    %v1175 = vsub.s32 0, %v1174
    %v1176 = vrot.slane %v37, %v1175
    %v1181 = vunpack.c.l.b16 %v75
    %v1182 = vunpack.c.l.b16 %v76
    %v1183 = vunpack.c.l.b16 %v77
    %v1184 = vunpack.c.l.b16 %v78
    %v1185 = vpack.c.b16 %v1182, %v1181
    %v1186 = vpack.c.b16 %v1184, %v1183
    %v1190 = vsel %vm197, %v1172, 0
    %1192 = vmatprep.subr.bf16.mxu0 0
    %1193 = vmatpush1.bf16.msra.mxu0 %v1185
    %1194 = vmatprep.subr.bf16.mxu0 0
    %1195 = vmatpush1.bf16.msra.mxu0 %v1186
    %1196 = vmatprep.subr.bf16.mxu0 0
    %1197 = vmatpush1.bf16.msra.mxu0 0
    %1198 = vmatprep.subr.bf16.mxu0 0
    %1199 = vmatpush1.bf16.msra.mxu0 0
    %1200 = vmatprep.subr.bf16.mxu0 0
    %1201 = vmatpush1.bf16.msra.mxu0 0
    %1202 = vmatprep.subr.bf16.mxu0 0
    %1203 = vmatpush1.bf16.msra.mxu0 0
    %1204 = vmatprep.subr.bf16.mxu0 0
    %1205 = vmatpush1.bf16.msra.mxu0 0
    %1206 = vmatprep.subr.bf16.mxu0 0
    %1207 = vmatpush1.bf16.msra.mxu0 0
    %1208 = vmatprep.subr.bf16.mxu0 0
    %1209 = vmatpush1.bf16.msra.mxu0 0
    %1210 = vmatprep.subr.bf16.mxu0 0
    %1211 = vmatpush1.bf16.msra.mxu0 0
    %1212 = vmatprep.subr.bf16.mxu0 0
    %1213 = vmatpush1.bf16.msra.mxu0 0
    %1214 = vmatprep.subr.bf16.mxu0 0
    %1215 = vmatpush1.bf16.msra.mxu0 0
    %1216 = vmatprep.subr.bf16.mxu0 0
    %1217 = vmatpush1.bf16.msra.mxu0 0
    %1218 = vmatprep.subr.bf16.mxu0 0
    %1219 = vmatpush1.bf16.msra.mxu0 0
    %1220 = vmatprep.subr.bf16.mxu0 0
    %1221 = vmatpush1.bf16.msra.mxu0 0
    %1222 = vmatprep.subr.bf16.mxu0 0
    %1223 = vmatpush1.bf16.msra.mxu0 0
    %1224 = vmatprep.mubr.bf16.mxu0 0
    %1225 = vmatmul.mubr.bf16.gmra.mrb[0].mxu0 %v1190
    %v1226 = vpop.f32.mrb[0].mxu0
    %v1227 = vadd.f32 %v1176, %v1226
    %v1228 = vpop.f32.mrb[0].mxu0
    %v1229 = vpop.f32.mrb[0].mxu0
    %v1230 = vpop.f32.mrb[0].mxu0
    %1231 = vdwg.mxu0
    %v1232 = vtanh.pop %v1227
    %vm1233 = vcmask 254976
    %1234 = vst.msk [vmem:[#allocation4] sm:$0x3] %vm1233, %v1232
    %v1235 = vpack.c.bf16 %v1232, %v1232
    %v1236 = vlaneseq
    %v1237 = vshrl.u32 %v1236, 7
    %v1238 = vsub.s32 0, %v1237
    %v1239 = vrot.slane %v38, %v1238
    %v1244 = vunpack.c.l.b16 %v87
    %v1245 = vunpack.c.l.b16 %v88
    %v1246 = vunpack.c.l.b16 %v89
    %v1247 = vunpack.c.l.b16 %v90
    %v1248 = vpack.c.b16 %v1245, %v1244
    %v1249 = vpack.c.b16 %v1247, %v1246
    %v1253 = vsel %vm197, %v1235, 0
    %1255 = vmatprep.subr.bf16.mxu0 0
    %1256 = vmatpush1.bf16.msra.mxu0 %v1248
    %1257 = vmatprep.subr.bf16.mxu0 0
    %1258 = vmatpush1.bf16.msra.mxu0 %v1249
    %1259 = vmatprep.subr.bf16.mxu0 0
    %1260 = vmatpush1.bf16.msra.mxu0 0
    %1261 = vmatprep.subr.bf16.mxu0 0
    %1262 = vmatpush1.bf16.msra.mxu0 0
    %1263 = vmatprep.subr.bf16.mxu0 0
    %1264 = vmatpush1.bf16.msra.mxu0 0
    %1265 = vmatprep.subr.bf16.mxu0 0
    %1266 = vmatpush1.bf16.msra.mxu0 0
    %1267 = vmatprep.subr.bf16.mxu0 0
    %1268 = vmatpush1.bf16.msra.mxu0 0
    %1269 = vmatprep.subr.bf16.mxu0 0
    %1270 = vmatpush1.bf16.msra.mxu0 0
    %1271 = vmatprep.subr.bf16.mxu0 0
    %1272 = vmatpush1.bf16.msra.mxu0 0
    %1273 = vmatprep.subr.bf16.mxu0 0
    %1274 = vmatpush1.bf16.msra.mxu0 0
    %1275 = vmatprep.subr.bf16.mxu0 0
    %1276 = vmatpush1.bf16.msra.mxu0 0
    %1277 = vmatprep.subr.bf16.mxu0 0
    %1278 = vmatpush1.bf16.msra.mxu0 0
    %1279 = vmatprep.subr.bf16.mxu0 0
    %1280 = vmatpush1.bf16.msra.mxu0 0
    %1281 = vmatprep.subr.bf16.mxu0 0
    %1282 = vmatpush1.bf16.msra.mxu0 0
    %1283 = vmatprep.subr.bf16.mxu0 0
    %1284 = vmatpush1.bf16.msra.mxu0 0
    %1285 = vmatprep.subr.bf16.mxu0 0
    %1286 = vmatpush1.bf16.msra.mxu0 0
    %1287 = vmatprep.mubr.bf16.mxu0 0
    %1288 = vmatmul.mubr.bf16.gmra.mrb[0].mxu0 %v1253
    %v1289 = vpop.f32.mrb[0].mxu0
    %v1290 = vadd.f32 %v1239, %v1289
    %v1291 = vpop.f32.mrb[0].mxu0
    %v1292 = vpop.f32.mrb[0].mxu0
    %v1293 = vpop.f32.mrb[0].mxu0
    %1294 = vdwg.mxu0
    %1295 = vst [vmem:[#allocation6] sm:$0x3] %v1290
    // Predicated region
    $region22: #{speaker_classifier_forward.1} parent=1 // pred_check
      _
    $region23: #{speaker_classifier_forward.1} parent=1 // pred_check_branch
      %1297 = sbr.rel (0) target = $region25
    $region24: #{speaker_classifier_forward.1} parent=1 // pred_region
      %s1299 = ssub.s32 256, 256
      %1300 = vsyncadd [#allocation3], %s1299
      %s1301 = sshll.u32 [#allocation2], 4
      %s1302 = int_to_ptr.vmem [resolvable:$true] %s1301
      %1307 = dma.vmem_to_hbm [thread:$0]  %s1302, 256, %s5, [#allocation3], 128, 128, 8
    $region25: #{speaker_classifier_forward.1} parent=1 // pred_fallthru
      _
    // Predicated region
    $region26: #{speaker_classifier_forward.1} parent=1 // pred_check
      _
    $region27: #{speaker_classifier_forward.1} parent=1 // pred_check_branch
      %1309 = sbr.rel (0) target = $region29
    $region28: #{speaker_classifier_forward.1} parent=1 // pred_region
      %s1311 = ssub.s32 32, 32
      %1312 = vsyncadd [#allocation5], %s1311
      %s1314 = sshll.u32 [#allocation4], 4
      %s1315 = int_to_ptr.vmem [resolvable:$true] %s1314
      %1317 = dma.vmem_to_hbm [thread:$0]  %s1315, 32, %s6, [#allocation5]
    $region29: #{speaker_classifier_forward.1} parent=1 // pred_fallthru
      _
    // Predicated region
    $region30: #{speaker_classifier_forward.1} parent=1 // pred_check
      _
    $region31: #{speaker_classifier_forward.1} parent=1 // pred_check_branch
      %1319 = sbr.rel (0) target = $region33
    $region32: #{speaker_classifier_forward.1} parent=1 // pred_region
      %s1321 = ssub.s32 32, 32
      %1322 = vsyncadd [#allocation5], %s1321
      %s1324 = sshll.u32 [#allocation6], 4
      %s1325 = int_to_ptr.vmem [resolvable:$true] %s1324
      %1327 = dma.vmem_to_hbm [thread:$0]  %s1325, 32, %s7, [#allocation5]
    $region33: #{speaker_classifier_forward.1} parent=1 // pred_fallthru
      _
    // Predicated region
    $region34: #{speaker_classifier_forward.1} parent=1 // pred_check
      _
    $region35: #{speaker_classifier_forward.1} parent=1 // pred_check_branch
      %1329 = sbr.rel (0) target = $region37
    $region36: #{speaker_classifier_forward.1} parent=1 // pred_region
      %1330 = dma.done [#allocation3], 256
    $region37: #{speaker_classifier_forward.1} parent=1 // pred_fallthru
      _
    // Predicated region
    $region38: #{speaker_classifier_forward.1} parent=1 // pred_check
      _
    $region39: #{speaker_classifier_forward.1} parent=1 // pred_check_branch
      %1332 = sbr.rel (0) target = $region41
    $region40: #{speaker_classifier_forward.1} parent=1 // pred_region
      %1333 = dma.done [#allocation5], 32
    $region41: #{speaker_classifier_forward.1} parent=1 // pred_fallthru
      _
    // Predicated region
    $region42: #{speaker_classifier_forward.1} parent=1 // pred_check
      _
    $region43: #{speaker_classifier_forward.1} parent=1 // pred_check_branch
      %1335 = sbr.rel (0) target = $region45
    $region44: #{speaker_classifier_forward.1} parent=1 // pred_region
      %1336 = dma.done [#allocation5], 32
    $region45: #{speaker_classifier_forward.1} parent=1 // pred_fallthru
      _
    %1337 = vsyncpa [#allocation3], 1
    %1338 = vsyncpa [#allocation5], 1

</llo_original>
